<compile_context>
chip_gen: v7x
topology: tpu7x:2x2x1
jax: 0.10.0
libtpu: 0.0.40
codegen_flags: <defaults>
</compile_context>

<pallas_src>
import functools

import numpy as np
import jax
import jax.numpy as jnp
from jax.experimental import pallas as pl
from jax.experimental.pallas import tpu as pltpu

EPS = 1e-5
_LANE = 128
_ROW0 = 16      # interior row offset inside the padded scratch (= bf16 sublane tile)


def _round_up(x, m):
    return (x + m - 1) // m * m


def _nbytes(shape, dtype):
    n = 1
    for d in shape:
        n *= int(d)
    return n * np.dtype(dtype).itemsize


# ---------------------------------------------------------------------------
# in-kernel helpers
# ---------------------------------------------------------------------------
def _conv3x3_banded(a_bf16, m_ref, pad_ref, tile_n, H, WCi, WCi_pad):
    """3x3 conv (pad=1, stride=1, no bias) as ONE banded MXU matmul per tile.

    a_bf16:  (tile_n*H, WCi) bf16 activation (post BN+ReLU).
    m_ref:   (3*WCi_pad, W*Co) bf16 banded weight (dh taps stacked along K; dw taps
             and the zero padding along W folded into the band structure).
    pad_ref: (tile_n, _ROW0+H+1, WCi_pad) bf16 scratch.
    Returns  (tile_n*H, W*Co) f32.
    """
    rows = tile_n * H
    a = a_bf16
    if WCi_pad > WCi:
        # lane-pad with zeros so the scratch store is unmasked (lane-dense) and the
        # padded lanes (read back below) can never contain garbage NaN/Inf.
        a = jnp.concatenate(
            [a, jnp.zeros((rows, WCi_pad - WCi), a.dtype)], axis=-1)

    # zero the two h-halo rows every step (cheap; megacore-safe since each core owns
    # its own scratch and does this itself), then rewrite the interior only.
    z = jnp.zeros((tile_n, 1, WCi_pad), a.dtype)
    pad_ref[:, _ROW0 - 1:_ROW0, :] = z                       # image row -1
    pad_ref[:, _ROW0 + H:_ROW0 + H + 1, :] = z               # image row  H
    pad_ref[:, _ROW0:_ROW0 + H, :] = a.reshape(tile_n, H, WCi_pad)

    # concat the 3 shifted row views along K -> single K = 3*WCi_pad matmul.
    a_cat = jnp.concatenate(
        [pad_ref[:, _ROW0 - 1 + dh:_ROW0 - 1 + dh + H, :] for dh in range(3)],
        axis=-1).reshape(rows, 3 * WCi_pad)
    return jnp.dot(a_cat, m_ref[...], preferred_element_type=jnp.float32)


def _stage1_kernel(x_ref, m1_ref, s1_ref, b1_ref, y1_ref, st_ref, pad_ref, *,
                   tile_n, H, WCi, WCi_pad):
    """bn1 (single FMA) + relu + conv1; also emits per-tile partial y1 statistics."""
    a1 = jnp.maximum(x_ref[...] * s1_ref[...] + b1_ref[...], 0.0).astype(jnp.bfloat16)
    y1 = _conv3x3_banded(a1, m1_ref, pad_ref, tile_n, H, WCi, WCi_pad)
    s = jnp.sum(y1, axis=0, keepdims=True)                    # (1, W*Co) f32
    ss = jnp.sum(y1 * y1, axis=0, keepdims=True)               # (1, W*Co) f32
    st_ref[...] = jnp.concatenate([s, ss], axis=0).reshape(st_ref.shape)
    y1_ref[...] = y1.astype(y1_ref.dtype)                      # bf16 intermediate


def _stage2_id_kernel(x_ref, y1_ref, m2_ref, s2_ref, b2_ref, o_ref, pad_ref, *,
                      tile_n, H, WCo, WCo_pad):
    """bn2 + relu + conv2 + identity residual."""
    a2 = jnp.maximum(y1_ref[...].astype(jnp.float32) * s2_ref[...] + b2_ref[...],
                     0.0).astype(jnp.bfloat16)
    y2 = _conv3x3_banded(a2, m2_ref, pad_ref, tile_n, H, WCo, WCo_pad)
    o_ref[...] = (y2 + x_ref[...]).astype(o_ref.dtype)


def _stage2_proj_kernel(x_ref, y1_ref, m2_ref, ws_ref, s2_ref, b2_ref, ss_ref,
                        bs_ref, o_ref, pad_ref, *, tile_n, H, WCo, WCo_pad):
    """bn2 + relu + conv2 + projection shortcut (bn_s -> relu -> 1x1 conv) residual."""
    a2 = jnp.maximum(y1_ref[...].astype(jnp.float32) * s2_ref[...] + b2_ref[...],
                     0.0).astype(jnp.bfloat16)
    y2 = _conv3x3_banded(a2, m2_ref, pad_ref, tile_n, H, WCo, WCo_pad)
    a_s = jnp.maximum(x_ref[...] * ss_ref[...] + bs_ref[...], 0.0).astype(jnp.bfloat16)
    sc = jnp.dot(a_s, ws_ref[...], preferred_element_type=jnp.float32)
    o_ref[...] = (y2 + sc).astype(o_ref.dtype)


# ---------------------------------------------------------------------------
# wrapper-side weight / parameter transforms (run once in XLA, outside kernels)
# ---------------------------------------------------------------------------
def _banded_conv3_weight(w_hwio, W, k_pad):
    """(3,3,Ci,Co) HWIO -> (3*k_pad, W*Co) bf16 banded weight.

    Block dh occupies rows [dh*k_pad, dh*k_pad + W*Ci) with
    m[dh*k_pad + wi*Ci+ci, w*Co+co] = w[dh, wi-w+1, ci, co] for |wi-w| <= 1;
    rows [W*Ci, k_pad) of each block are zero (lane padding).
    """
    kh, kw, Ci, Co = w_hwio.shape
    w32 = w_hwio.astype(jnp.float32)
    blocks = []
    for dh in range(kh):
        m = jnp.zeros((W * Ci, W * Co), jnp.float32)
        for dw in range(kw):
            band = jnp.eye(W, W, k=1 - dw, dtype=jnp.float32)   # band[wi,w]=1 iff wi=w-1+dw
            m = m + jnp.kron(band, w32[dh, dw])
        if k_pad > W * Ci:
            m = jnp.pad(m, ((0, k_pad - W * Ci), (0, 0)))
        blocks.append(m)
    return jnp.concatenate(blocks, axis=0).astype(jnp.bfloat16)


def _bn_fold(gamma, beta, mean, var):
    """Fold BN into a single FMA: x*scale + bias (per channel)."""
    scale = gamma.reshape(-1) * jax.lax.rsqrt(var + EPS)
    bias = beta.reshape(-1) - mean * scale
    return scale, bias


def _tile_per_channel(v, W):
    """(C,) per-channel vector -> (1, W*C), matching the (N*H, W*C) activation view."""
    return jnp.tile(jnp.reshape(v, (1, -1)), (1, W))


def _row_spec(rows, width):
    return pl.BlockSpec((rows, width), lambda i: (i, 0))


def _bcast_spec(shape):
    return pl.BlockSpec(tuple(shape), lambda i: (0,) * len(shape))


def _cparams(step_bytes, scratch_bytes):
    """Explicit scoped-VMEM budget: double-buffered step tiles + scratch + headroom,
    clamped to stay inside every chip's physical VMEM (v7x: 64 MiB/TensorCore)."""
    limit = 2 * step_bytes + scratch_bytes + (8 << 20)
    limit = int(min(max(limit, 16 << 20), 48 << 20))
    return pltpu.CompilerParams(dimension_semantics=("parallel",),
                                vmem_limit_bytes=limit)


# ---------------------------------------------------------------------------
# public forward
# ---------------------------------------------------------------------------
@functools.partial(jax.jit, static_argnames=("tile_n", "out_dtype"))
def basic_block_forward_nhwc(x_nhwc, params, tile_n=1, out_dtype=None):
    """Fast path: NHWC in, NHWC out.  tile_n images per grid step (batch tiling)."""
    N, H, W, Cin = x_nhwc.shape
    Cout = params["w1"].shape[-1]
    assert N % tile_n == 0, "tile_n must divide the batch size"
    out_dtype = out_dtype or x_nhwc.dtype

    WCi, WCo = W * Cin, W * Cout
    WCi_pad, WCo_pad = _round_up(WCi, _LANE), _round_up(WCo, _LANE)
    rows = tile_n * H
    grid = (N // tile_n,)
    n_px = N * H * W

    xf = x_nhwc.astype(jnp.float32)
    x2 = xf.reshape(N * H, WCi)                      # lane-dense (N*H, W*Cin) view

    # ---- pass 0: batch stats of x (two-pass XLA reduce; shared by bn1 and bn_s) ----
    mean_x = jnp.mean(xf, axis=(0, 1, 2))
    var_x = jnp.mean(jnp.square(xf - mean_x), axis=(0, 1, 2))
    s1, b1 = _bn_fold(params["g1"], params["b1"], mean_x, var_x)
    s1t, b1t = _tile_per_channel(s1, W), _tile_per_channel(b1, W)

    m1 = _banded_conv3_weight(params["w1"], W, WCi_pad)      # (3*WCi_pad, WCo) bf16
    m2 = _banded_conv3_weight(params["w2"], W, WCo_pad)      # (3*WCo_pad, WCo) bf16

    # ---- stage 1: bn1 -> relu -> conv1 (+ per-tile partial y1 stats) ----
    scratch1_bytes = _nbytes((tile_n, _ROW0 + H + 1, WCi_pad), jnp.bfloat16)
    step1_bytes = (_nbytes((rows, WCi), jnp.float32)
                   + _nbytes(m1.shape, jnp.bfloat16)
                   + 2 * _nbytes((1, WCi), jnp.float32)
                   + _nbytes((rows, WCo), jnp.bfloat16)
                   + _nbytes((1, 2, WCo), jnp.float32))
    y1, stats = pl.pallas_call(
        functools.partial(_stage1_kernel, tile_n=tile_n, H=H,
                          WCi=WCi, WCi_pad=WCi_pad),
        grid=grid,
        in_specs=[_row_spec(rows, WCi), _bcast_spec(m1.shape),
                  _bcast_spec(s1t.shape), _bcast_spec(b1t.shape)],
        out_specs=[_row_spec(rows, WCo),
                   pl.BlockSpec((1, 2, WCo), lambda i: (i, 0, 0))],
        out_shape=[jax.ShapeDtypeStruct((N * H, WCo), jnp.bfloat16),
                   jax.ShapeDtypeStruct((grid[0], 2, WCo), jnp.float32)],
        scratch_shapes=[pltpu.VMEM((tile_n, _ROW0 + H + 1, WCi_pad), jnp.bfloat16)],
        compiler_params=_cparams(step1_bytes, scratch1_bytes),
    )(x2, m1, s1t, b1t)

    # ---- fold y1 partial stats (tiny XLA reduce); clamp var to avoid rsqrt(<0) ----
    st = stats.sum(axis=0).reshape(2, W, Cout).sum(axis=1)   # (2, Cout)
    mean1 = st[0] / n_px
    var1 = jnp.maximum(st[1] / n_px - mean1 * mean1, 0.0)
    s2, b2 = _bn_fold(params["g2"], params["b2"], mean1, var1)
    s2t, b2t = _tile_per_channel(s2, W), _tile_per_channel(b2, W)

    # ---- stage 2: bn2 -> relu -> conv2 + shortcut + residual ----
    scratch2_bytes = _nbytes((tile_n, _ROW0 + H + 1, WCo_pad), jnp.bfloat16)
    step2_common = (_nbytes((rows, WCi), jnp.float32)
                    + _nbytes((rows, WCo), jnp.bfloat16)
                    + _nbytes(m2.shape, jnp.bfloat16)
                    + 2 * _nbytes((1, WCo), jnp.float32)
                    + _nbytes((rows, WCo), out_dtype))
    scratch2 = pltpu.VMEM((tile_n, _ROW0 + H + 1, WCo_pad), jnp.bfloat16)

    if "ws" not in params:                                   # identity shortcut
        out2 = pl.pallas_call(
            functools.partial(_stage2_id_kernel, tile_n=tile_n, H=H,
                              WCo=WCo, WCo_pad=WCo_pad),
            grid=grid,
            in_specs=[_row_spec(rows, WCi), _row_spec(rows, WCo),
                      _bcast_spec(m2.shape), _bcast_spec(s2t.shape),
                      _bcast_spec(b2t.shape)],
            out_specs=_row_spec(rows, WCo),
            out_shape=jax.ShapeDtypeStruct((N * H, WCo), out_dtype),
            scratch_shapes=[scratch2],
            compiler_params=_cparams(step2_common, scratch2_bytes),
        )(x2, y1, m2, s2t, b2t)
    else:                                                    # projection shortcut
        ss, bs = _bn_fold(params["gs"], params["bs"], mean_x, var_x)  # shared x stats
        sst, bst = _tile_per_channel(ss, W), _tile_per_channel(bs, W)
        ws_blk = jnp.kron(jnp.eye(W, dtype=jnp.float32),
                          params["ws"][0, 0].astype(jnp.float32)).astype(jnp.bfloat16)
        step2_bytes = (step2_common + _nbytes(ws_blk.shape, jnp.bfloat16)
                       + 2 * _nbytes((1, WCi), jnp.float32))
        out2 = pl.pallas_call(
            functools.partial(_stage2_proj_kernel, tile_n=tile_n, H=H,
                              WCo=WCo, WCo_pad=WCo_pad),
            grid=grid,
            in_specs=[_row_spec(rows, WCi), _row_spec(rows, WCo),
                      _bcast_spec(m2.shape), _bcast_spec(ws_blk.shape),
                      _bcast_spec(s2t.shape), _bcast_spec(b2t.shape),
                      _bcast_spec(sst.shape), _bcast_spec(bst.shape)],
            out_specs=_row_spec(rows, WCo),
            out_shape=jax.ShapeDtypeStruct((N * H, WCo), out_dtype),
            scratch_shapes=[scratch2],
            compiler_params=_cparams(step2_bytes, scratch2_bytes),
        )(x2, y1, m2, ws_blk, s2t, b2t, sst, bst)

    return out2.reshape(N, H, W, Cout)


def basic_block_forward(x_nchw, params, stride=1):
    """PyTorch-layout adapter (NCHW in / NCHW out).  Prefer the NHWC entry point:
    these transposes are full HBM round-trips of the activation."""
    if stride != 1:
        # TODO(synk): stride > 1 downsampling (strided 3x3 / 1x1 conv) not implemented.
        raise NotImplementedError("stride != 1 not supported by this Pallas kernel")
    x = jnp.transpose(x_nchw, (0, 2, 3, 1))
    y = basic_block_forward_nhwc(x, params)
    return jnp.transpose(y, (0, 3, 1, 2))


# ---------------------------------------------------------------------------
# deterministic parameter init + plain-JAX reference
# ---------------------------------------------------------------------------
def init_params(key, inplanes, planes):
    ks = jax.random.split(key, 10)
    # round conv weights to bf16-representable values so the bf16 MXU path and the
    # f32 reference use identical weights.
    rnd = lambda w: w.astype(jnp.bfloat16).astype(jnp.float32)
    p = {}
    p["w1"] = rnd(jax.random.normal(ks[0], (3, 3, inplanes, planes), jnp.float32)
                  * (9 * inplanes) ** -0.5)
    p["w2"] = rnd(jax.random.normal(ks[1], (3, 3, planes, planes), jnp.float32)
                  * (9 * planes) ** -0.5)
    p["g1"] = 1.0 + 0.1 * jax.random.normal(ks[2], (1, inplanes), jnp.float32)
    p["b1"] = 0.1 * jax.random.normal(ks[3], (1, inplanes), jnp.float32)
    p["g2"] = 1.0 + 0.1 * jax.random.normal(ks[4], (1, planes), jnp.float32)
    p["b2"] = 0.1 * jax.random.normal(ks[5], (1, planes), jnp.float32)
    if inplanes != planes:
        p["ws"] = rnd(jax.random.normal(ks[6], (1, 1, inplanes, planes), jnp.float32)
                      * inplanes ** -0.5)
        p["gs"] = 1.0 + 0.1 * jax.random.normal(ks[7], (1, inplanes), jnp.float32)
        p["bs"] = 0.1 * jax.random.normal(ks[8], (1, inplanes), jnp.float32)
    return p


def _ref_bn_relu(x, g, b):
    m = x.mean(axis=(0, 1, 2), keepdims=True)
    v = ((x - m) ** 2).mean(axis=(0, 1, 2), keepdims=True)
    return jax.nn.relu((x - m) / jnp.sqrt(v + EPS) * g.reshape(1, 1, 1, -1)
                       + b.reshape(1, 1, 1, -1))


def ref_forward_nhwc(x, p):
    dn = ("NHWC", "HWIO", "NHWC")
    a1 = _ref_bn_relu(x, p["g1"], p["b1"])
    y1 = jax.lax.conv_general_dilated(a1, p["w1"], (1, 1), "SAME", dimension_numbers=dn)
    a2 = _ref_bn_relu(y1, p["g2"], p["b2"])
    y2 = jax.lax.conv_general_dilated(a2, p["w2"], (1, 1), "SAME", dimension_numbers=dn)
    if "ws" in p:
        a_s = _ref_bn_relu(x, p["gs"], p["bs"])
        sc = jax.lax.conv_general_dilated(a_s, p["ws"], (1, 1), "SAME", dimension_numbers=dn)
    else:
        sc = x
    return y2 + sc


# ---------------------------------------------------------------------------
if __name__ == "__main__":
    key = jax.random.PRNGKey(0)
    N, H, W = 2, 16, 16

    # Config A: identity shortcut (inplanes == planes == 8), NHWC fast path.
    p_a = init_params(jax.random.fold_in(key, 1), 8, 8)
    x_a = jax.random.normal(jax.random.fold_in(key, 2), (N, H, W, 8), jnp.float32)
    out_a = jax.block_until_ready(basic_block_forward_nhwc(x_a, p_a))
    ref_a = ref_forward_nhwc(x_a, p_a)
    assert out_a.shape == (N, H, W, 8)
    err_a = float(jnp.max(jnp.abs(out_a - ref_a)))
    assert jnp.allclose(out_a, ref_a, rtol=3e-2, atol=3e-2), err_a

    # Config B: projection shortcut (inplanes=4 != planes=8), NCHW adapter.
    p_b = init_params(jax.random.fold_in(key, 3), 4, 8)
    x_b = jax.random.normal(jax.random.fold_in(key, 4), (N, 4, H, W), jnp.float32)
    out_b = jax.block_until_ready(basic_block_forward(x_b, p_b))
    ref_b = jnp.transpose(
        ref_forward_nhwc(jnp.transpose(x_b, (0, 2, 3, 1)), p_b), (0, 3, 1, 2))
    assert out_b.shape == (N, 8, H, W)
    err_b = float(jnp.max(jnp.abs(out_b - ref_b)))
    assert jnp.allclose(out_b, ref_b, rtol=3e-2, atol=3e-2), err_b

    print("KERNEL_OK")
</pallas_src>

<mosaic_0001>
module attributes {stable_mosaic.version = 11 : i64} {
  func.func @_stage1_kernel(%arg0: i32, %arg1: memref<16x128xf32, #tpu.memory_space<vmem>>, %arg2: memref<384x128xbf16, #tpu.memory_space<vmem>>, %arg3: memref<1x128xf32, #tpu.memory_space<vmem>>, %arg4: memref<1x128xf32, #tpu.memory_space<vmem>>, %arg5: memref<16x128xbf16, #tpu.memory_space<vmem>>, %arg6: memref<1x2x128xf32, #tpu.memory_space<vmem>>, %arg7: memref<1x33x128xbf16, #tpu.memory_space<vmem>>) attributes {dimension_semantics = [#tpu.dimension_semantics<parallel>], iteration_bounds = array<i64: 2>, scalar_prefetch = 0 : i64, scratch_operands = 1 : i64, tpu.core_type = #tpu.core_type<tc>, window_params = [{transform_indices = @transform_0, window_bounds = array<i64: 16, 128>}, {pipeline_mode = #tpu.pipeline_mode<synchronous>, transform_indices = @transform_1, window_bounds = array<i64: 384, 128>}, {pipeline_mode = #tpu.pipeline_mode<synchronous>, transform_indices = @transform_2, window_bounds = array<i64: 1, 128>}, {pipeline_mode = #tpu.pipeline_mode<synchronous>, transform_indices = @transform_3, window_bounds = array<i64: 1, 128>}, {transform_indices = @transform_4, window_bounds = array<i64: 16, 128>}, {transform_indices = @transform_5, window_bounds = array<i64: 1, 2, 128>}]} {
    %c0 = arith.constant 0 : index
    %c0_0 = arith.constant 0 : index
    %0 = vector.load %arg1[%c0, %c0_0] : memref<16x128xf32, #tpu.memory_space<vmem>>, vector<16x128xf32>
    %c0_1 = arith.constant 0 : index
    %c0_2 = arith.constant 0 : index
    %1 = vector.load %arg3[%c0_1, %c0_2] : memref<1x128xf32, #tpu.memory_space<vmem>>, vector<1x128xf32>
    %2 = vector.broadcast %1 : vector<1x128xf32> to vector<16x128xf32>
    %3 = arith.mulf %0, %2 : vector<16x128xf32>
    %c0_3 = arith.constant 0 : index
    %c0_4 = arith.constant 0 : index
    %4 = vector.load %arg4[%c0_3, %c0_4] : memref<1x128xf32, #tpu.memory_space<vmem>>, vector<1x128xf32>
    %5 = vector.broadcast %4 : vector<1x128xf32> to vector<16x128xf32>
    %6 = arith.addf %3, %5 : vector<16x128xf32>
    %cst = arith.constant 0.000000e+00 : f32
    %7 = vector.broadcast %cst : f32 to vector<16x128xf32>
    %8 = arith.maximumf %6, %7 : vector<16x128xf32>
    %9 = arith.truncf %8 : vector<16x128xf32> to vector<16x128xbf16>
    %cst_5 = arith.constant 0.000000e+00 : bf16
    %10 = vector.broadcast %cst_5 : bf16 to vector<1x1x128xbf16>
    %c0_6 = arith.constant 0 : index
    %c15 = arith.constant 15 : index
    %c0_7 = arith.constant 0 : index
    %11 = vector.load %arg7[%c0_6, %c15, %c0_7] : memref<1x33x128xbf16, #tpu.memory_space<vmem>>, vector<1x1x128xbf16>
    tpu.vector_store %arg7[%c0_6, %c15, %c0_7], %10 {strides = array<i32>} : memref<1x33x128xbf16, #tpu.memory_space<vmem>>, vector<1x1x128xbf16>,
    %c0_8 = arith.constant 0 : index
    %c32 = arith.constant 32 : index
    %c0_9 = arith.constant 0 : index
    %12 = vector.load %arg7[%c0_8, %c32, %c0_9] : memref<1x33x128xbf16, #tpu.memory_space<vmem>>, vector<1x1x128xbf16>
    tpu.vector_store %arg7[%c0_8, %c32, %c0_9], %10 {strides = array<i32>} : memref<1x33x128xbf16, #tpu.memory_space<vmem>>, vector<1x1x128xbf16>,
    %13 = vector.shape_cast %9 : vector<16x128xbf16> to vector<1x16x128xbf16>
    %c0_10 = arith.constant 0 : index
    %c16 = arith.constant 16 : index
    %c0_11 = arith.constant 0 : index
    %14 = vector.load %arg7[%c0_10, %c16, %c0_11] : memref<1x33x128xbf16, #tpu.memory_space<vmem>>, vector<1x16x128xbf16>
    tpu.vector_store %arg7[%c0_10, %c16, %c0_11], %13 {strides = array<i32>} : memref<1x33x128xbf16, #tpu.memory_space<vmem>>, vector<1x16x128xbf16>,
    %c0_12 = arith.constant 0 : index
    %c15_13 = arith.constant 15 : index
    %c0_14 = arith.constant 0 : index
    %15 = vector.load %arg7[%c0_12, %c15_13, %c0_14] : memref<1x33x128xbf16, #tpu.memory_space<vmem>>, vector<1x16x128xbf16>
    %c0_15 = arith.constant 0 : index
    %c16_16 = arith.constant 16 : index
    %c0_17 = arith.constant 0 : index
    %16 = vector.load %arg7[%c0_15, %c16_16, %c0_17] : memref<1x33x128xbf16, #tpu.memory_space<vmem>>, vector<1x16x128xbf16>
    %c0_18 = arith.constant 0 : index
    %c17 = arith.constant 17 : index
    %c0_19 = arith.constant 0 : index
    %17 = vector.load %arg7[%c0_18, %c17, %c0_19] : memref<1x33x128xbf16, #tpu.memory_space<vmem>>, vector<1x16x128xbf16>
    %18 = tpu.concatenate %15, %16, %17 in 2 : vector<1x16x128xbf16>, vector<1x16x128xbf16>, vector<1x16x128xbf16> -> vector<1x16x384xbf16>
    %19 = vector.shape_cast %18 : vector<1x16x384xbf16> to vector<16x384xbf16>
    %c0_20 = arith.constant 0 : index
    %c0_21 = arith.constant 0 : index
    %20 = vector.load %arg2[%c0_20, %c0_21] : memref<384x128xbf16, #tpu.memory_space<vmem>>, vector<384x128xbf16>
    %cst_22 = arith.constant dense<0.000000e+00> : vector<16x128xf32>
    %21 = tpu.matmul %19, %20, %cst_22 {dimension_numbers = #tpu.dot_dimension_numbers<[1], [0], [0], [1], [0, 0, 1, 1], [], []>} : vector<16x384xbf16>, vector<384x128xbf16>, vector<16x128xf32> -> vector<16x128xf32>
    %cst_23 = arith.constant dense<0.000000e+00> : vector<128xf32>
    %22 = vector.multi_reduction <add>, %21, %cst_23 [0] : vector<16x128xf32> to vector<128xf32>
    %23 = vector.shape_cast %22 : vector<128xf32> to vector<1x128xf32>
    %24 = arith.mulf %21, %21 : vector<16x128xf32>
    %cst_24 = arith.constant dense<0.000000e+00> : vector<128xf32>
    %25 = vector.multi_reduction <add>, %24, %cst_24 [0] : vector<16x128xf32> to vector<128xf32>
    %26 = vector.shape_cast %25 : vector<128xf32> to vector<1x128xf32>
    %27 = tpu.concatenate %23, %26 in 0 : vector<1x128xf32>, vector<1x128xf32> -> vector<2x128xf32>
    %28 = vector.shape_cast %27 : vector<2x128xf32> to vector<1x2x128xf32>
    %c0_25 = arith.constant 0 : index
    %c0_26 = arith.constant 0 : index
    %c0_27 = arith.constant 0 : index
    %29 = vector.load %arg6[%c0_25, %c0_26, %c0_27] : memref<1x2x128xf32, #tpu.memory_space<vmem>>, vector<1x2x128xf32>
    tpu.vector_store %arg6[%c0_25, %c0_26, %c0_27], %28 {strides = array<i32>} : memref<1x2x128xf32, #tpu.memory_space<vmem>>, vector<1x2x128xf32>,
    %30 = arith.truncf %21 : vector<16x128xf32> to vector<16x128xbf16>
    %c0_28 = arith.constant 0 : index
    %c0_29 = arith.constant 0 : index
    %31 = vector.load %arg5[%c0_28, %c0_29] : memref<16x128xbf16, #tpu.memory_space<vmem>>, vector<16x128xbf16>
    tpu.vector_store %arg5[%c0_28, %c0_29], %30 {strides = array<i32>} : memref<16x128xbf16, #tpu.memory_space<vmem>>, vector<16x128xbf16>,
    return
  }
  func.func @transform_0(%arg0: i32) -> (i32, i32) {
    %c0_i32 = arith.constant 0 : i32
    %c0_i32_0 = arith.constant 0 : i32
    return %arg0, %c0_i32 : i32, i32
  }
  func.func @transform_1(%arg0: i32) -> (i32, i32) {
    %c0_i32 = arith.constant 0 : i32
    %c0_i32_0 = arith.constant 0 : i32
    %c0_i32_1 = arith.constant 0 : i32
    return %c0_i32, %c0_i32_0 : i32, i32
  }
  func.func @transform_2(%arg0: i32) -> (i32, i32) {
    %c0_i32 = arith.constant 0 : i32
    %c0_i32_0 = arith.constant 0 : i32
    %c0_i32_1 = arith.constant 0 : i32
    return %c0_i32, %c0_i32_0 : i32, i32
  }
  func.func @transform_3(%arg0: i32) -> (i32, i32) {
    %c0_i32 = arith.constant 0 : i32
    %c0_i32_0 = arith.constant 0 : i32
    %c0_i32_1 = arith.constant 0 : i32
    return %c0_i32, %c0_i32_0 : i32, i32
  }
  func.func @transform_4(%arg0: i32) -> (i32, i32) {
    %c0_i32 = arith.constant 0 : i32
    %c0_i32_0 = arith.constant 0 : i32
    return %arg0, %c0_i32 : i32, i32
  }
  func.func @transform_5(%arg0: i32) -> (i32, i32, i32) {
    %c0_i32 = arith.constant 0 : i32
    %c0_i32_0 = arith.constant 0 : i32
    %c0_i32_1 = arith.constant 0 : i32
    return %arg0, %c0_i32, %c0_i32_0 : i32, i32, i32
  }
}

module attributes {stable_mosaic.version = 11 : i64} {
  func.func @_stage2_id_kernel(%arg0: i32, %arg1: memref<16x128xf32, #tpu.memory_space<vmem>>, %arg2: memref<16x128xbf16, #tpu.memory_space<vmem>>, %arg3: memref<384x128xbf16, #tpu.memory_space<vmem>>, %arg4: memref<1x128xf32, #tpu.memory_space<vmem>>, %arg5: memref<1x128xf32, #tpu.memory_space<vmem>>, %arg6: memref<16x128xf32, #tpu.memory_space<vmem>>, %arg7: memref<1x33x128xbf16, #tpu.memory_space<vmem>>) attributes {dimension_semantics = [#tpu.dimension_semantics<parallel>], iteration_bounds = array<i64: 2>, scalar_prefetch = 0 : i64, scratch_operands = 1 : i64, tpu.core_type = #tpu.core_type<tc>, window_params = [{transform_indices = @transform_0, window_bounds = array<i64: 16, 128>}, {transform_indices = @transform_1, window_bounds = array<i64: 16, 128>}, {pipeline_mode = #tpu.pipeline_mode<synchronous>, transform_indices = @transform_2, window_bounds = array<i64: 384, 128>}, {pipeline_mode = #tpu.pipeline_mode<synchronous>, transform_indices = @transform_3, window_bounds = array<i64: 1, 128>}, {pipeline_mode = #tpu.pipeline_mode<synchronous>, transform_indices = @transform_4, window_bounds = array<i64: 1, 128>}, {transform_indices = @transform_5, window_bounds = array<i64: 16, 128>}]} {
    %c0 = arith.constant 0 : index
    %c0_0 = arith.constant 0 : index
    %0 = vector.load %arg2[%c0, %c0_0] : memref<16x128xbf16, #tpu.memory_space<vmem>>, vector<16x128xbf16>
    %1 = arith.extf %0 : vector<16x128xbf16> to vector<16x128xf32>
    %c0_1 = arith.constant 0 : index
    %c0_2 = arith.constant 0 : index
    %2 = vector.load %arg4[%c0_1, %c0_2] : memref<1x128xf32, #tpu.memory_space<vmem>>, vector<1x128xf32>
    %3 = vector.broadcast %2 : vector<1x128xf32> to vector<16x128xf32>
    %4 = arith.mulf %1, %3 : vector<16x128xf32>
    %c0_3 = arith.constant 0 : index
    %c0_4 = arith.constant 0 : index
    %5 = vector.load %arg5[%c0_3, %c0_4] : memref<1x128xf32, #tpu.memory_space<vmem>>, vector<1x128xf32>
    %6 = vector.broadcast %5 : vector<1x128xf32> to vector<16x128xf32>
    %7 = arith.addf %4, %6 : vector<16x128xf32>
    %cst = arith.constant 0.000000e+00 : f32
    %8 = vector.broadcast %cst : f32 to vector<16x128xf32>
    %9 = arith.maximumf %7, %8 : vector<16x128xf32>
    %10 = arith.truncf %9 : vector<16x128xf32> to vector<16x128xbf16>
    %cst_5 = arith.constant 0.000000e+00 : bf16
    %11 = vector.broadcast %cst_5 : bf16 to vector<1x1x128xbf16>
    %c0_6 = arith.constant 0 : index
    %c15 = arith.constant 15 : index
    %c0_7 = arith.constant 0 : index
    %12 = vector.load %arg7[%c0_6, %c15, %c0_7] : memref<1x33x128xbf16, #tpu.memory_space<vmem>>, vector<1x1x128xbf16>
    tpu.vector_store %arg7[%c0_6, %c15, %c0_7], %11 {strides = array<i32>} : memref<1x33x128xbf16, #tpu.memory_space<vmem>>, vector<1x1x128xbf16>,
    %c0_8 = arith.constant 0 : index
    %c32 = arith.constant 32 : index
    %c0_9 = arith.constant 0 : index
    %13 = vector.load %arg7[%c0_8, %c32, %c0_9] : memref<1x33x128xbf16, #tpu.memory_space<vmem>>, vector<1x1x128xbf16>
    tpu.vector_store %arg7[%c0_8, %c32, %c0_9], %11 {strides = array<i32>} : memref<1x33x128xbf16, #tpu.memory_space<vmem>>, vector<1x1x128xbf16>,
    %14 = vector.shape_cast %10 : vector<16x128xbf16> to vector<1x16x128xbf16>
    %c0_10 = arith.constant 0 : index
    %c16 = arith.constant 16 : index
    %c0_11 = arith.constant 0 : index
    %15 = vector.load %arg7[%c0_10, %c16, %c0_11] : memref<1x33x128xbf16, #tpu.memory_space<vmem>>, vector<1x16x128xbf16>
    tpu.vector_store %arg7[%c0_10, %c16, %c0_11], %14 {strides = array<i32>} : memref<1x33x128xbf16, #tpu.memory_space<vmem>>, vector<1x16x128xbf16>,
    %c0_12 = arith.constant 0 : index
    %c15_13 = arith.constant 15 : index
    %c0_14 = arith.constant 0 : index
    %16 = vector.load %arg7[%c0_12, %c15_13, %c0_14] : memref<1x33x128xbf16, #tpu.memory_space<vmem>>, vector<1x16x128xbf16>
    %c0_15 = arith.constant 0 : index
    %c16_16 = arith.constant 16 : index
    %c0_17 = arith.constant 0 : index
    %17 = vector.load %arg7[%c0_15, %c16_16, %c0_17] : memref<1x33x128xbf16, #tpu.memory_space<vmem>>, vector<1x16x128xbf16>
    %c0_18 = arith.constant 0 : index
    %c17 = arith.constant 17 : index
    %c0_19 = arith.constant 0 : index
    %18 = vector.load %arg7[%c0_18, %c17, %c0_19] : memref<1x33x128xbf16, #tpu.memory_space<vmem>>, vector<1x16x128xbf16>
    %19 = tpu.concatenate %16, %17, %18 in 2 : vector<1x16x128xbf16>, vector<1x16x128xbf16>, vector<1x16x128xbf16> -> vector<1x16x384xbf16>
    %20 = vector.shape_cast %19 : vector<1x16x384xbf16> to vector<16x384xbf16>
    %c0_20 = arith.constant 0 : index
    %c0_21 = arith.constant 0 : index
    %21 = vector.load %arg3[%c0_20, %c0_21] : memref<384x128xbf16, #tpu.memory_space<vmem>>, vector<384x128xbf16>
    %cst_22 = arith.constant dense<0.000000e+00> : vector<16x128xf32>
    %22 = tpu.matmul %20, %21, %cst_22 {dimension_numbers = #tpu.dot_dimension_numbers<[1], [0], [0], [1], [0, 0, 1, 1], [], []>} : vector<16x384xbf16>, vector<384x128xbf16>, vector<16x128xf32> -> vector<16x128xf32>
    %c0_23 = arith.constant 0 : index
    %c0_24 = arith.constant 0 : index
    %23 = vector.load %arg1[%c0_23, %c0_24] : memref<16x128xf32, #tpu.memory_space<vmem>>, vector<16x128xf32>
    %24 = arith.addf %22, %23 : vector<16x128xf32>
    %c0_25 = arith.constant 0 : index
    %c0_26 = arith.constant 0 : index
    %25 = vector.load %arg6[%c0_25, %c0_26] : memref<16x128xf32, #tpu.memory_space<vmem>>, vector<16x128xf32>
    tpu.vector_store %arg6[%c0_25, %c0_26], %24 {strides = array<i32>} : memref<16x128xf32, #tpu.memory_space<vmem>>, vector<16x128xf32>,
    return
  }
  func.func @transform_0(%arg0: i32) -> (i32, i32) {
    %c0_i32 = arith.constant 0 : i32
    %c0_i32_0 = arith.constant 0 : i32
    return %arg0, %c0_i32 : i32, i32
  }
  func.func @transform_1(%arg0: i32) -> (i32, i32) {
    %c0_i32 = arith.constant 0 : i32
    %c0_i32_0 = arith.constant 0 : i32
    return %arg0, %c0_i32 : i32, i32
  }
  func.func @transform_2(%arg0: i32) -> (i32, i32) {
    %c0_i32 = arith.constant 0 : i32
    %c0_i32_0 = arith.constant 0 : i32
    %c0_i32_1 = arith.constant 0 : i32
    return %c0_i32, %c0_i32_0 : i32, i32
  }
  func.func @transform_3(%arg0: i32) -> (i32, i32) {
    %c0_i32 = arith.constant 0 : i32
    %c0_i32_0 = arith.constant 0 : i32
    %c0_i32_1 = arith.constant 0 : i32
    return %c0_i32, %c0_i32_0 : i32, i32
  }
  func.func @transform_4(%arg0: i32) -> (i32, i32) {
    %c0_i32 = arith.constant 0 : i32
    %c0_i32_0 = arith.constant 0 : i32
    %c0_i32_1 = arith.constant 0 : i32
    return %c0_i32, %c0_i32_0 : i32, i32
  }
  func.func @transform_5(%arg0: i32) -> (i32, i32) {
    %c0_i32 = arith.constant 0 : i32
    %c0_i32_0 = arith.constant 0 : i32
    return %arg0, %c0_i32 : i32, i32
  }
}

</mosaic_0001>

<llo_original>
// kernel: basic_block_forward_nhwc.2
$region0: #{basic_block_forward_nhwc.2}
  #allocation0 [shape = 'u32[]', space=smem, size = 0x4, offset = 0x4, fixed_abs, tag = 'smem constant byte address 0x4 - core index']
  #allocation1 [shape = 'u32[144,128]{1,0:T(1,128)}', space=vmem, size = 0x12000, scoped, tag = 'internal scratch']
  #allocation2 [shape = 'bf16[1,33,128]{2,1,0:T(8,128)(2,1)}', space=vmem, size = 0x2800, scoped, tag = 'scratch operand']
  %s0 = inlined_call_operand.vmem [shape: f32[32,128], index: 0, kind: input, shape index: {}]
  %s1 = inlined_call_operand.vmem [shape: bf16[384,128], index: 1, kind: input, shape index: {}]
  %s2 = inlined_call_operand.vmem [shape: f32[1,128], index: 2, kind: input, shape index: {}]
  %s3 = inlined_call_operand.vmem [shape: f32[1,128], index: 3, kind: input, shape index: {}]
  %s4 = inlined_call_operand.vmem [shape: bf16[32,128], index: 4, kind: output, shape index: {0}]
  %s5 = inlined_call_operand.vmem [shape: f32[2,2,128], index: 5, kind: output, shape index: {1}]
  %6 = xla_tuple %s4, %s5
  %s7 = sld [smem:[#allocation0]]
  $region57: #{basic_block_forward_nhwc.2} parent=0
    _
  %s9 = ssub.s32 1, %s7
  %s10 = scalar_select 0, %s9, %s7
  loop: start=0, step=1, limit=4
  $region2: #{basic_block_forward_nhwc.2} parent=0 // loop_pre_header
    _
  $region3: #{basic_block_forward_nhwc.2} parent=0 // loop_header
    %s12 = sphi 0, %s16
    %p13 = scmp.ge.s32.totalorder %s12, 4
    %s22 = sphi 0, %s24
    %s25 = sphi 0, %s22
    %s26 = sphi 0, %s25
    %s42 = sphi 0, %s26
    %s46 = sphi 0, %s46
    %s48 = sphi 0, %s46
    %s49 = sphi 0, %s48
    %s63 = sphi 0, %s49
    %s67 = sphi 0, %s67
    %s69 = sphi 0, %s67
    %s70 = sphi 0, %s69
    %s84 = sphi 0, %s70
    %s88 = sphi 0, %s88
    %s90 = sphi 0, %s88
    %s91 = sphi 0, %s90
    %s105 = sphi 0, %s91
    %s111 = sphi 0, %s113
    %s114 = sphi 0, %s111
    %s115 = sphi 0, %s114
    %s131 = sphi 0, %s115
    %s137 = sphi 0, %s139
    %s140 = sphi 0, %s137
    %s141 = sphi 0, %s140
    %s157 = sphi 0, %s141
  $region4: #{basic_block_forward_nhwc.2} parent=0 // loop_header_branch
    %15 = sbr.rel (%p13) target = $region8
  $region5: #{basic_block_forward_nhwc.2} parent=0 // loop_body
    %s17 = ssub.s32 %s12, 1
    %s18 = ssub.s32 %s12, 2
    %s19 = sadd.s32 %s12, 1
    %s20 = ssub.s32 %s12, %s19
    %p21 = scmp.eq.s32.totalorder %s20, 0
    %s23 = sadd.s32 %s22, 1
    %s24 = scalar_select %p21, %s22, %s23
    %p27 = pneg %p21
    %p28 = scmp.eq.s32.totalorder %s12, 1
    %p29 = por %p27, %p28
    %p30 = scmp.ne.s32.totalorder %s22, %s25
    %p31 = scmp.eq.s32.totalorder %s12, 0
    %p32 = por %p30, %p31
    %p33 = scmp.ne.s32.totalorder %s22, %s25
    %p34 = scmp.eq.s32.totalorder %s17, 1
    %p35 = por %p33, %p34
    %p36 = scmp.ne.s32.totalorder %s25, %s26
    %p37 = scmp.eq.s32.totalorder %s17, 0
    %p38 = por %p36, %p37
    %p39 = scmp.ne.s32.totalorder %s25, %s26
    %p40 = scmp.eq.s32.totalorder %s18, 1
    %p41 = por %p39, %p40
    %p43 = scmp.ne.s32.totalorder %s26, %s42
    %p44 = scmp.eq.s32.totalorder %s18, 0
    %p45 = por %p43, %p44
    %s47 = sadd.s32 %s46, 1
    %p50 = scmp.eq.s32.totalorder %s12, 1
    %p51 = scmp.ne.s32.totalorder %s46, %s48
    %p52 = scmp.eq.s32.totalorder %s12, 0
    %p53 = por %p51, %p52
    %p54 = scmp.ne.s32.totalorder %s46, %s48
    %p55 = scmp.eq.s32.totalorder %s17, 1
    %p56 = por %p54, %p55
    %p57 = scmp.ne.s32.totalorder %s48, %s49
    %p58 = scmp.eq.s32.totalorder %s17, 0
    %p59 = por %p57, %p58
    %p60 = scmp.ne.s32.totalorder %s48, %s49
    %p61 = scmp.eq.s32.totalorder %s18, 1
    %p62 = por %p60, %p61
    %p64 = scmp.ne.s32.totalorder %s49, %s63
    %p65 = scmp.eq.s32.totalorder %s18, 0
    %p66 = por %p64, %p65
    %s68 = sadd.s32 %s67, 1
    %p71 = scmp.eq.s32.totalorder %s12, 1
    %p72 = scmp.ne.s32.totalorder %s67, %s69
    %p73 = scmp.eq.s32.totalorder %s12, 0
    %p74 = por %p72, %p73
    %p75 = scmp.ne.s32.totalorder %s67, %s69
    %p76 = scmp.eq.s32.totalorder %s17, 1
    %p77 = por %p75, %p76
    %p78 = scmp.ne.s32.totalorder %s69, %s70
    %p79 = scmp.eq.s32.totalorder %s17, 0
    %p80 = por %p78, %p79
    %p81 = scmp.ne.s32.totalorder %s69, %s70
    %p82 = scmp.eq.s32.totalorder %s18, 1
    %p83 = por %p81, %p82
    %p85 = scmp.ne.s32.totalorder %s70, %s84
    %p86 = scmp.eq.s32.totalorder %s18, 0
    %p87 = por %p85, %p86
    %s89 = sadd.s32 %s88, 1
    %p92 = scmp.eq.s32.totalorder %s12, 1
    %p93 = scmp.ne.s32.totalorder %s88, %s90
    %p94 = scmp.eq.s32.totalorder %s12, 0
    %p95 = por %p93, %p94
    %p96 = scmp.ne.s32.totalorder %s88, %s90
    %p97 = scmp.eq.s32.totalorder %s17, 1
    %p98 = por %p96, %p97
    %p99 = scmp.ne.s32.totalorder %s90, %s91
    %p100 = scmp.eq.s32.totalorder %s17, 0
    %p101 = por %p99, %p100
    %p102 = scmp.ne.s32.totalorder %s90, %s91
    %p103 = scmp.eq.s32.totalorder %s18, 1
    %p104 = por %p102, %p103
    %p106 = scmp.ne.s32.totalorder %s91, %s105
    %p107 = scmp.eq.s32.totalorder %s18, 0
    %p108 = por %p106, %p107
    %s109 = ssub.s32 %s12, %s19
    %p110 = scmp.eq.s32.totalorder %s109, 0
    %s112 = sadd.s32 %s111, 1
    %s113 = scalar_select %p110, %s111, %s112
    %p116 = pneg %p110
    %p117 = scmp.eq.s32.totalorder %s12, 1
    %p118 = por %p116, %p117
    %p119 = scmp.ne.s32.totalorder %s111, %s114
    %p120 = scmp.eq.s32.totalorder %s12, 0
    %p121 = por %p119, %p120
    %p122 = scmp.ne.s32.totalorder %s111, %s114
    %p123 = scmp.eq.s32.totalorder %s17, 1
    %p124 = por %p122, %p123
    %p125 = scmp.ne.s32.totalorder %s114, %s115
    %p126 = scmp.eq.s32.totalorder %s17, 0
    %p127 = por %p125, %p126
    %p128 = scmp.ne.s32.totalorder %s114, %s115
    %p129 = scmp.eq.s32.totalorder %s18, 1
    %p130 = por %p128, %p129
    %p132 = scmp.ne.s32.totalorder %s115, %s131
    %p133 = scmp.eq.s32.totalorder %s18, 0
    %p134 = por %p132, %p133
    %s135 = ssub.s32 %s12, %s19
    %p136 = scmp.eq.s32.totalorder %s135, 0
    %s138 = sadd.s32 %s137, 1
    %s139 = scalar_select %p136, %s137, %s138
    %p142 = pneg %p136
    %p143 = scmp.eq.s32.totalorder %s12, 1
    %p144 = por %p142, %p143
    %p145 = scmp.ne.s32.totalorder %s137, %s140
    %p146 = scmp.eq.s32.totalorder %s12, 0
    %p147 = por %p145, %p146
    %p148 = scmp.ne.s32.totalorder %s137, %s140
    %p149 = scmp.eq.s32.totalorder %s17, 1
    %p150 = por %p148, %p149
    %p151 = scmp.ne.s32.totalorder %s140, %s141
    %p152 = scmp.eq.s32.totalorder %s17, 0
    %p153 = por %p151, %p152
    %p154 = scmp.ne.s32.totalorder %s140, %s141
    %p155 = scmp.eq.s32.totalorder %s18, 1
    %p156 = por %p154, %p155
    %p158 = scmp.ne.s32.totalorder %s141, %s157
    %p159 = scmp.eq.s32.totalorder %s18, 0
    %p160 = por %p158, %p159
    %p161 = scmp.le.s32.totalorder 1, %s12
    %p162 = scmp.lt.s32.totalorder %s12, 3
    %p163 = pnand %p161, %p162
    %p164 = pneg %p163
    // Predicated region
    $region9: #{basic_block_forward_nhwc.2} parent=5 // pred_check
      _
    $region10: #{basic_block_forward_nhwc.2} parent=5 // pred_check_branch
      %166 = sbr.rel (%p163) target = $region12
    $region11: #{basic_block_forward_nhwc.2} parent=5 // pred_region
      %s167 = ssub.s32 %s12, 1
      // Predicated region
      $region13: #{basic_block_forward_nhwc.2} parent=11 // pred_check
        %p168 = pneg %p59
      $region14: #{basic_block_forward_nhwc.2} parent=11 // pred_check_branch
        %170 = sbr.rel (%p168) target = $region16
      $region15: #{basic_block_forward_nhwc.2} parent=11 // pred_region
        _
      $region16: #{basic_block_forward_nhwc.2} parent=11 // pred_fallthru
        _
      // Predicated region
      $region17: #{basic_block_forward_nhwc.2} parent=11 // pred_check
        %p171 = pneg %p80
      $region18: #{basic_block_forward_nhwc.2} parent=11 // pred_check_branch
        %173 = sbr.rel (%p171) target = $region20
      $region19: #{basic_block_forward_nhwc.2} parent=11 // pred_region
        _
      $region20: #{basic_block_forward_nhwc.2} parent=11 // pred_fallthru
        _
      // Predicated region
      $region21: #{basic_block_forward_nhwc.2} parent=11 // pred_check
        %p174 = pneg %p101
      $region22: #{basic_block_forward_nhwc.2} parent=11 // pred_check_branch
        %176 = sbr.rel (%p174) target = $region24
      $region23: #{basic_block_forward_nhwc.2} parent=11 // pred_region
        _
      $region24: #{basic_block_forward_nhwc.2} parent=11 // pred_fallthru
        _
    $region12: #{basic_block_forward_nhwc.2} parent=5 // pred_fallthru
      _
    %p177 = scmp.lt.s32.totalorder %s12, 2
    // Predicated region
    $region25: #{basic_block_forward_nhwc.2} parent=5 // pred_check
      %p178 = pneg %p177
    $region26: #{basic_block_forward_nhwc.2} parent=5 // pred_check_branch
      %180 = sbr.rel (%p178) target = $region28
    $region27: #{basic_block_forward_nhwc.2} parent=5 // pred_region
      // Predicated region
      $region29: #{basic_block_forward_nhwc.2} parent=27 // pred_check
        %p181 = pneg %p32
      $region30: #{basic_block_forward_nhwc.2} parent=27 // pred_check_branch
        %183 = sbr.rel (%p181) target = $region32
      $region31: #{basic_block_forward_nhwc.2} parent=27 // pred_region
        %s184 = smul.u32 2, %s12
        %p185 = scmp.lt.s32.totalorder %s184, 3
        %s186 = scalar_select %p185, %s184, 3
        %s187 = smul.addr %s186, 8
        %s188 = scalar_lea.vmem %s0, %s187
        %s189 = smul.u32 2, %s12
      $region32: #{basic_block_forward_nhwc.2} parent=27 // pred_fallthru
        _
    $region28: #{basic_block_forward_nhwc.2} parent=5 // pred_fallthru
      _
    %p190 = scmp.le.s32.totalorder 1, %s12
    %p191 = scmp.lt.s32.totalorder %s12, 3
    %p192 = pnand %p190, %p191
    %p193 = pneg %p192
    // Predicated region
    $region33: #{basic_block_forward_nhwc.2} parent=5 // pred_check
      _
    $region34: #{basic_block_forward_nhwc.2} parent=5 // pred_check_branch
      %195 = sbr.rel (%p192) target = $region36
    $region35: #{basic_block_forward_nhwc.2} parent=5 // pred_region
      %s196 = ssub.s32 %s12, 1
      %s197 = smul.u32 2, %s17
      %p198 = scmp.lt.s32.totalorder %s197, 3
      %s199 = scalar_select %p198, %s197, 3
      %s200 = smul.addr %s199, 8
      %s201 = scalar_lea.vmem %s0, %s200
      %p202 = pneg %p38
      %p203 = pneg %p35
      %p204 = pneg %p59
      %p205 = pneg %p56
      %p206 = pneg %p80
      %p207 = pneg %p77
      %p208 = pneg %p101
      %p209 = pneg %p98
      %p210 = pneg %p127
      %p211 = pneg %p124
      %s212 = smul.u32 2, %s17
      %p213 = scmp.lt.s32.totalorder %s212, 3
      %s214 = scalar_select %p213, %s212, 3
      %s215 = smul.addr %s214, 4
      %s216 = scalar_lea.vmem %s4, %s215
      %p217 = pneg %p153
      %p218 = pneg %p150
      %p219 = scmp.lt.s32.totalorder %s17, 1
      %s220 = scalar_select %p219, %s17, 1
      %s221 = smul.addr %s220, 2
      %s222 = scalar_lea.vmem %s5, %s221
      %s223 = smul.u32 2, %s17
      %p224 = scmp.lt.s32.totalorder %s223, 3
      %s225 = scalar_select %p224, %s223, 3
      %s226 = smul.addr %s225, 8
      %s227 = scalar_lea.vmem %s0, %s226
      %s228 = smul.u32 2, %s17
      %s229 = smul.u32 2, %s17
      %p230 = scmp.lt.s32.totalorder %s229, 3
      %s231 = scalar_select %p230, %s229, 3
      %s232 = smul.addr %s231, 4
      %s233 = scalar_lea.vmem %s4, %s232
      %s234 = smul.u32 2, %s17
      %p235 = scmp.lt.s32.totalorder %s17, 1
      %s236 = scalar_select %p235, %s17, 1
      %s237 = smul.addr %s236, 2
      %s238 = scalar_lea.vmem %s5, %s237
      %v240 = vld [vmem:[%s227] sm:$0xff]
      %v241 = vld [vmem:[%s227 + $0x8] sm:$0xff]
      %v242 = vld [vmem:[%s2] sm:$0x1]
      %v244 = vlaneseq
      %v245 = vshrl.u32 %v244, 7
      %v246 = vsub.s32 0, %v245
      %v247 = vrot.slane %v242, %v246
      %v249 = vmul.f32 %v240, %v247
      %v250 = vmul.f32 %v241, %v247
      %v251 = vld [vmem:[%s3] sm:$0x1]
      %v253 = vlaneseq
      %v254 = vshrl.u32 %v253, 7
      %v255 = vsub.s32 0, %v254
      %v256 = vrot.slane %v251, %v255
      %v258 = vadd.f32 %v249, %v256
      %v259 = vadd.f32 %v250, %v256
      %v260 = vmax.f32 %v258, 0.0
      %v261 = vmax.f32 %v259, 0.0
      %v262 = vpack.c.bf16 %v261, %v260
      %vm263 = vcmask 1043459
      %vm264 = vsmask.f32 7950
      %vm265 = vmand %vm263, %vm264
      %v266 = vld [vmem:[#allocation2 + $0x4] sm:$0x8]
      %v267 = vsel %vm265, 0, %v266
      %268 = vst [vmem:[#allocation2 + $0x4] sm:$0x8] %v267
      %vm269 = vcmask 1040384
      %vm270 = vsmask.f32 256
      %vm271 = vmand %vm269, %vm270
      %v272 = vld [vmem:[#allocation2 + $0x10] sm:$0x1]
      %v273 = vsel %vm271, 0, %v272
      %274 = vst [vmem:[#allocation2 + $0x10] sm:$0x1] %v273
      %v276 = vunpack.c.l.b16 %v262
      %v277 = vunpack.c.h.b16 %v262
      %v278 = vpack.c.b16 %v276, %v276
      %v279 = vpack.c.b16 %v277, %v277
      %282 = vst [vmem:[#allocation2 + $0x8] sm:$0xf] %v278
      %283 = vst [vmem:[#allocation2 + $0xc] sm:$0xf] %v279
      %v284 = vld [vmem:[#allocation2 + $0x4] sm:$0x8]
      %v285 = vld [vmem:[#allocation2 + $0x8] sm:$0xf]
      %v286 = vld [vmem:[#allocation2 + $0xc] sm:$0xf]
      %v287 = vld [vmem:[#allocation2 + $0x10] sm:$0x1]
      %v291 = vunpack.c.l.b16 %v284
      %v292 = vunpack.c.l.b16 %v285
      %v293 = vunpack.c.l.b16 %v286
      %v294 = vpack.c.b16 %v292, %v291
      %v295 = vpack.c.b16 %v293, %v293
      %v296 = vpack.c.b16 %v293, %v292
      %v298 = vshrl.u32 %v296, 16
      %v300 = vrot.slane %v298, 4
      %v301 = vshll.u32 %v296, 16
      %v303 = vrot.slane %v301, 5
      %v304 = vor.u32 %v300, %v303
      %v306 = vunpack.c.l.b16 %v287
      %v307 = vpack.c.b16 %v306, %v306
      %vm308 = vcmask 1042432
      %v309 = vrot.slane %v296, 5
      %v310 = vrot.slane %v307, 5
      %v311 = vsel %vm308, %v309, %v310
      %v312 = vld [vmem:[%s1] sm:$0xf]
      %v313 = vld [vmem:[%s1 + $0x4] sm:$0xf]
      %v314 = vld [vmem:[%s1 + $0x8] sm:$0xf]
      %v315 = vld [vmem:[%s1 + $0xc] sm:$0xf]
      %v316 = vld [vmem:[%s1 + $0x10] sm:$0xf]
      %v317 = vld [vmem:[%s1 + $0x14] sm:$0xf]
      %v318 = vld [vmem:[%s1 + $0x18] sm:$0xf]
      %v319 = vld [vmem:[%s1 + $0x1c] sm:$0xf]
      %v320 = vld [vmem:[%s1 + $0x20] sm:$0xf]
      %v321 = vld [vmem:[%s1 + $0x24] sm:$0xf]
      %v322 = vld [vmem:[%s1 + $0x28] sm:$0xf]
      %v323 = vld [vmem:[%s1 + $0x2c] sm:$0xf]
      %v324 = vld [vmem:[%s1 + $0x30] sm:$0xf]
      %v325 = vld [vmem:[%s1 + $0x34] sm:$0xf]
      %v326 = vld [vmem:[%s1 + $0x38] sm:$0xf]
      %v327 = vld [vmem:[%s1 + $0x3c] sm:$0xf]
      %v328 = vld [vmem:[%s1 + $0x40] sm:$0xf]
      %v329 = vld [vmem:[%s1 + $0x44] sm:$0xf]
      %v330 = vld [vmem:[%s1 + $0x48] sm:$0xf]
      %v331 = vld [vmem:[%s1 + $0x4c] sm:$0xf]
      %v332 = vld [vmem:[%s1 + $0x50] sm:$0xf]
      %v333 = vld [vmem:[%s1 + $0x54] sm:$0xf]
      %v334 = vld [vmem:[%s1 + $0x58] sm:$0xf]
      %v335 = vld [vmem:[%s1 + $0x5c] sm:$0xf]
      %v336 = vld [vmem:[%s1 + $0x60] sm:$0xf]
      %v337 = vld [vmem:[%s1 + $0x64] sm:$0xf]
      %v338 = vld [vmem:[%s1 + $0x68] sm:$0xf]
      %v339 = vld [vmem:[%s1 + $0x6c] sm:$0xf]
      %v340 = vld [vmem:[%s1 + $0x70] sm:$0xf]
      %v341 = vld [vmem:[%s1 + $0x74] sm:$0xf]
      %v342 = vld [vmem:[%s1 + $0x78] sm:$0xf]
      %v343 = vld [vmem:[%s1 + $0x7c] sm:$0xf]
      %v344 = vld [vmem:[%s1 + $0x80] sm:$0xf]
      %v345 = vld [vmem:[%s1 + $0x84] sm:$0xf]
      %v346 = vld [vmem:[%s1 + $0x88] sm:$0xf]
      %v347 = vld [vmem:[%s1 + $0x8c] sm:$0xf]
      %v348 = vld [vmem:[%s1 + $0x90] sm:$0xf]
      %v349 = vld [vmem:[%s1 + $0x94] sm:$0xf]
      %v350 = vld [vmem:[%s1 + $0x98] sm:$0xf]
      %v351 = vld [vmem:[%s1 + $0x9c] sm:$0xf]
      %v352 = vld [vmem:[%s1 + $0xa0] sm:$0xf]
      %v353 = vld [vmem:[%s1 + $0xa4] sm:$0xf]
      %v354 = vld [vmem:[%s1 + $0xa8] sm:$0xf]
      %v355 = vld [vmem:[%s1 + $0xac] sm:$0xf]
      %v356 = vld [vmem:[%s1 + $0xb0] sm:$0xf]
      %v357 = vld [vmem:[%s1 + $0xb4] sm:$0xf]
      %v358 = vld [vmem:[%s1 + $0xb8] sm:$0xf]
      %v359 = vld [vmem:[%s1 + $0xbc] sm:$0xf]
      %vm360 = vsmask.f32 4352
      %v362 = vshrl.u32 %v294, 16
      %v364 = vrot.slane %v362, 3
      %v365 = vshll.u32 %v294, 16
      %v367 = vrot.slane %v365, 4
      %v368 = vor.u32 %v364, %v367
      %v370 = vshrl.u32 %v295, 16
      %v372 = vrot.slane %v370, 3
      %v373 = vshll.u32 %v295, 16
      %v375 = vrot.slane %v373, 4
      %v376 = vor.u32 %v372, %v375
      %v377 = vsel %vm360, %v368, %v376
      %v379 = vshrl.u32 %v304, 16
      %v381 = vrot.slane %v379, 3
      %v382 = vshll.u32 %v304, 16
      %v384 = vrot.slane %v382, 4
      %v385 = vor.u32 %v381, %v384
      %v386 = vsel %vm360, %v385, %v385
      %v388 = vshrl.u32 %v309, 16
      %v390 = vrot.slane %v388, 3
      %v391 = vshll.u32 %v309, 16
      %v393 = vrot.slane %v391, 4
      %v394 = vor.u32 %v390, %v393
      %v396 = vshrl.u32 %v311, 16
      %v398 = vrot.slane %v396, 3
      %v399 = vshll.u32 %v311, 16
      %v401 = vrot.slane %v399, 4
      %v402 = vor.u32 %v398, %v401
      %v403 = vsel %vm360, %v394, %v402
      %v455 = vunpack.c.l.b16 %v312
      %v456 = vunpack.c.l.b16 %v313
      %v457 = vunpack.c.l.b16 %v314
      %v458 = vunpack.c.l.b16 %v315
      %v459 = vunpack.c.l.b16 %v316
      %v460 = vunpack.c.l.b16 %v317
      %v461 = vunpack.c.l.b16 %v318
      %v462 = vunpack.c.l.b16 %v319
      %v463 = vunpack.c.l.b16 %v320
      %v464 = vunpack.c.l.b16 %v321
      %v465 = vunpack.c.l.b16 %v322
      %v466 = vunpack.c.l.b16 %v323
      %v467 = vunpack.c.l.b16 %v324
      %v468 = vunpack.c.l.b16 %v325
      %v469 = vunpack.c.l.b16 %v326
      %v470 = vunpack.c.l.b16 %v327
      %v471 = vunpack.c.l.b16 %v328
      %v472 = vunpack.c.l.b16 %v329
      %v473 = vunpack.c.l.b16 %v330
      %v474 = vunpack.c.l.b16 %v331
      %v475 = vunpack.c.l.b16 %v332
      %v476 = vunpack.c.l.b16 %v333
      %v477 = vunpack.c.l.b16 %v334
      %v478 = vunpack.c.l.b16 %v335
      %v479 = vunpack.c.l.b16 %v336
      %v480 = vunpack.c.l.b16 %v337
      %v481 = vunpack.c.l.b16 %v338
      %v482 = vunpack.c.l.b16 %v339
      %v483 = vunpack.c.l.b16 %v340
      %v484 = vunpack.c.l.b16 %v341
      %v485 = vunpack.c.l.b16 %v342
      %v486 = vunpack.c.l.b16 %v343
      %v487 = vunpack.c.l.b16 %v344
      %v488 = vunpack.c.l.b16 %v345
      %v489 = vunpack.c.l.b16 %v346
      %v490 = vunpack.c.l.b16 %v347
      %v491 = vunpack.c.l.b16 %v348
      %v492 = vunpack.c.l.b16 %v349
      %v493 = vunpack.c.l.b16 %v350
      %v494 = vunpack.c.l.b16 %v351
      %v495 = vunpack.c.l.b16 %v352
      %v496 = vunpack.c.l.b16 %v353
      %v497 = vunpack.c.l.b16 %v354
      %v498 = vunpack.c.l.b16 %v355
      %v499 = vunpack.c.l.b16 %v356
      %v500 = vunpack.c.l.b16 %v357
      %v501 = vunpack.c.l.b16 %v358
      %v502 = vunpack.c.l.b16 %v359
      %v503 = vpack.c.b16 %v456, %v455
      %v504 = vpack.c.b16 %v458, %v457
      %v505 = vpack.c.b16 %v460, %v459
      %v506 = vpack.c.b16 %v462, %v461
      %v507 = vpack.c.b16 %v464, %v463
      %v508 = vpack.c.b16 %v466, %v465
      %v509 = vpack.c.b16 %v468, %v467
      %v510 = vpack.c.b16 %v470, %v469
      %v511 = vpack.c.b16 %v472, %v471
      %v512 = vpack.c.b16 %v474, %v473
      %v513 = vpack.c.b16 %v476, %v475
      %v514 = vpack.c.b16 %v478, %v477
      %v515 = vpack.c.b16 %v480, %v479
      %v516 = vpack.c.b16 %v482, %v481
      %v517 = vpack.c.b16 %v484, %v483
      %v518 = vpack.c.b16 %v486, %v485
      %v519 = vpack.c.b16 %v488, %v487
      %v520 = vpack.c.b16 %v490, %v489
      %v521 = vpack.c.b16 %v492, %v491
      %v522 = vpack.c.b16 %v494, %v493
      %v523 = vpack.c.b16 %v496, %v495
      %v524 = vpack.c.b16 %v498, %v497
      %v525 = vpack.c.b16 %v500, %v499
      %v526 = vpack.c.b16 %v502, %v501
      %551 = vmatprep.subr.bf16.mxu0 0
      %552 = vmatpush1.bf16.msra.mxu0 %v503
      %553 = vmatprep.subr.bf16.mxu0 0
      %554 = vmatpush1.bf16.msra.mxu0 %v504
      %555 = vmatprep.subr.bf16.mxu0 0
      %556 = vmatpush1.bf16.msra.mxu0 %v505
      %557 = vmatprep.subr.bf16.mxu0 0
      %558 = vmatpush1.bf16.msra.mxu0 %v506
      %559 = vmatprep.subr.bf16.mxu0 0
      %560 = vmatpush1.bf16.msra.mxu0 %v507
      %561 = vmatprep.subr.bf16.mxu0 0
      %562 = vmatpush1.bf16.msra.mxu0 %v508
      %563 = vmatprep.subr.bf16.mxu0 0
      %564 = vmatpush1.bf16.msra.mxu0 %v509
      %565 = vmatprep.subr.bf16.mxu0 0
      %566 = vmatpush1.bf16.msra.mxu0 %v510
      %567 = vmatprep.subr.bf16.mxu0 0
      %568 = vmatpush1.bf16.msra.mxu0 %v511
      %569 = vmatprep.subr.bf16.mxu0 0
      %570 = vmatpush1.bf16.msra.mxu0 %v512
      %571 = vmatprep.subr.bf16.mxu0 0
      %572 = vmatpush1.bf16.msra.mxu0 %v513
      %573 = vmatprep.subr.bf16.mxu0 0
      %574 = vmatpush1.bf16.msra.mxu0 %v514
      %575 = vmatprep.subr.bf16.mxu0 0
      %576 = vmatpush1.bf16.msra.mxu0 %v515
      %577 = vmatprep.subr.bf16.mxu0 0
      %578 = vmatpush1.bf16.msra.mxu0 %v516
      %579 = vmatprep.subr.bf16.mxu0 0
      %580 = vmatpush1.bf16.msra.mxu0 %v517
      %581 = vmatprep.subr.bf16.mxu0 0
      %582 = vmatpush1.bf16.msra.mxu0 %v518
      %583 = vmatprep.mubr.bf16.mxu0 %v386
      %584 = vmatmul.mubr.bf16.gmra.mrb[0].mxu0 %v377
      %v585 = vpop.f32.mrb[0].mxu0
      %v586 = vadd.f32 0.0, %v585
      %v587 = vpop.f32.mrb[0].mxu0
      %v588 = vpop.f32.mrb[0].mxu0
      %v589 = vadd.f32 0.0, %v588
      %v590 = vpop.f32.mrb[0].mxu0
      %591 = vdwg.mxu0
      %592 = vmatprep.subr.bf16.mxu0 0
      %593 = vmatpush1.bf16.msra.mxu0 %v519
      %594 = vmatprep.subr.bf16.mxu0 0
      %595 = vmatpush1.bf16.msra.mxu0 %v520
      %596 = vmatprep.subr.bf16.mxu0 0
      %597 = vmatpush1.bf16.msra.mxu0 %v521
      %598 = vmatprep.subr.bf16.mxu0 0
      %599 = vmatpush1.bf16.msra.mxu0 %v522
      %600 = vmatprep.subr.bf16.mxu0 0
      %601 = vmatpush1.bf16.msra.mxu0 %v523
      %602 = vmatprep.subr.bf16.mxu0 0
      %603 = vmatpush1.bf16.msra.mxu0 %v524
      %604 = vmatprep.subr.bf16.mxu0 0
      %605 = vmatpush1.bf16.msra.mxu0 %v525
      %606 = vmatprep.subr.bf16.mxu0 0
      %607 = vmatpush1.bf16.msra.mxu0 %v526
      %608 = vmatprep.subr.bf16.mxu0 0
      %609 = vmatpush1.bf16.msra.mxu0 0
      %610 = vmatprep.subr.bf16.mxu0 0
      %611 = vmatpush1.bf16.msra.mxu0 0
      %612 = vmatprep.subr.bf16.mxu0 0
      %613 = vmatpush1.bf16.msra.mxu0 0
      %614 = vmatprep.subr.bf16.mxu0 0
      %615 = vmatpush1.bf16.msra.mxu0 0
      %616 = vmatprep.subr.bf16.mxu0 0
      %617 = vmatpush1.bf16.msra.mxu0 0
      %618 = vmatprep.subr.bf16.mxu0 0
      %619 = vmatpush1.bf16.msra.mxu0 0
      %620 = vmatprep.subr.bf16.mxu0 0
      %621 = vmatpush1.bf16.msra.mxu0 0
      %622 = vmatprep.subr.bf16.mxu0 0
      %623 = vmatpush1.bf16.msra.mxu0 0
      %624 = vmatprep.mubr.bf16.mxu0 0
      %625 = vmatmul.mubr.bf16.gmra.mrb[0].mxu0 %v403
      %v626 = vpop.f32.mrb[0].mxu0
      %v627 = vadd.f32 %v586, %v626
      %v628 = vpop.f32.mrb[0].mxu0
      %v629 = vpop.f32.mrb[0].mxu0
      %v630 = vadd.f32 %v589, %v629
      %v631 = vpop.f32.mrb[0].mxu0
      %632 = vdwg.mxu0
      %v633 = vadd.f32 %v627, %v630
      %v634 = vrot.slane %v633, 4
      %v635 = vadd.f32 %v633, %v634
      %v636 = vrot.slane %v635, 2
      %v637 = vadd.f32 %v635, %v636
      %v638 = vrot.slane %v637, 1
      %v639 = vadd.f32 %v637, %v638
      %v640 = vmul.f32 %v627, %v627
      %v641 = vmul.f32 %v630, %v630
      %v642 = vadd.f32 %v640, %v641
      %v643 = vrot.slane %v642, 4
      %v644 = vadd.f32 %v642, %v643
      %v645 = vrot.slane %v644, 2
      %v646 = vadd.f32 %v644, %v645
      %v647 = vrot.slane %v646, 1
      %v648 = vadd.f32 %v646, %v647
      %vm649 = vcmask 1040384
      %v650 = vsel %vm649, %v639, %v648
      %651 = vst [vmem:[%s238] sm:$0x3] %v650
      %v652 = vpack.c.bf16 %v630, %v627
      %v654 = vunpack.c.l.b16 %v652
      %v655 = vunpack.c.h.b16 %v652
      %v656 = vpack.c.b16 %v654, %v654
      %v657 = vpack.c.b16 %v655, %v655
      %660 = vst [vmem:[%s233] sm:$0xf] %v656
      %661 = vst [vmem:[%s233 + $0x4] sm:$0xf] %v657
      %s662 = smul.u32 2, %s17
      %p663 = scmp.lt.s32.totalorder %s662, 3
      %s664 = scalar_select %p663, %s662, 3
      %s665 = smul.addr %s664, 4
      %s666 = scalar_lea.vmem %s4, %s665
      %p667 = scmp.lt.s32.totalorder %s17, 1
      %s668 = scalar_select %p667, %s17, 1
      %s669 = smul.addr %s668, 2
      %s670 = scalar_lea.vmem %s5, %s669
      // Predicated region
      $region37: #{basic_block_forward_nhwc.2} parent=35 // pred_check
        %p671 = pneg %p124
      $region38: #{basic_block_forward_nhwc.2} parent=35 // pred_check_branch
        %673 = sbr.rel (%p671) target = $region40
      $region39: #{basic_block_forward_nhwc.2} parent=35 // pred_region
        %s674 = smul.u32 2, %s17
      $region40: #{basic_block_forward_nhwc.2} parent=35 // pred_fallthru
        _
      // Predicated region
      $region41: #{basic_block_forward_nhwc.2} parent=35 // pred_check
        %p675 = pneg %p150
      $region42: #{basic_block_forward_nhwc.2} parent=35 // pred_check_branch
        %677 = sbr.rel (%p675) target = $region44
      $region43: #{basic_block_forward_nhwc.2} parent=35 // pred_region
        _
      $region44: #{basic_block_forward_nhwc.2} parent=35 // pred_fallthru
        _
    $region36: #{basic_block_forward_nhwc.2} parent=5 // pred_fallthru
      _
    %p678 = scmp.le.s32.totalorder 2, %s12
    // Predicated region
    $region45: #{basic_block_forward_nhwc.2} parent=5 // pred_check
      %p679 = pneg %p678
    $region46: #{basic_block_forward_nhwc.2} parent=5 // pred_check_branch
      %681 = sbr.rel (%p679) target = $region48
    $region47: #{basic_block_forward_nhwc.2} parent=5 // pred_region
      %s682 = ssub.s32 %s12, 2
      // Predicated region
      $region49: #{basic_block_forward_nhwc.2} parent=47 // pred_check
        %p683 = pneg %p130
      $region50: #{basic_block_forward_nhwc.2} parent=47 // pred_check_branch
        %685 = sbr.rel (%p683) target = $region52
      $region51: #{basic_block_forward_nhwc.2} parent=47 // pred_region
        %s686 = smul.u32 2, %s18
        %p687 = scmp.lt.s32.totalorder %s686, 3
        %s688 = scalar_select %p687, %s686, 3
        %s689 = smul.addr %s688, 4
        %s690 = scalar_lea.vmem %s4, %s689
      $region52: #{basic_block_forward_nhwc.2} parent=47 // pred_fallthru
        _
      // Predicated region
      $region53: #{basic_block_forward_nhwc.2} parent=47 // pred_check
        %p691 = pneg %p156
      $region54: #{basic_block_forward_nhwc.2} parent=47 // pred_check_branch
        %693 = sbr.rel (%p691) target = $region56
      $region55: #{basic_block_forward_nhwc.2} parent=47 // pred_region
        %p694 = scmp.lt.s32.totalorder %s18, 1
        %s695 = scalar_select %p694, %s18, 1
        %s696 = smul.addr %s695, 2
        %s697 = scalar_lea.vmem %s5, %s696
      $region56: #{basic_block_forward_nhwc.2} parent=47 // pred_fallthru
        _
    $region48: #{basic_block_forward_nhwc.2} parent=5 // pred_fallthru
      _
  $region6: #{basic_block_forward_nhwc.2} parent=0 // loop_footer
    %s16 = sadd.s32 1, %s12
  $region7: #{basic_block_forward_nhwc.2} parent=0 // loop_footer_branch
    %11 = sbr.rel target = $region3
  $region8: #{basic_block_forward_nhwc.2} parent=0 // loop_exit
    _

// kernel: basic_block_forward_nhwc.3
$region0: #{basic_block_forward_nhwc.3}
  #allocation0 [shape = 'u32[]', space=smem, size = 0x4, offset = 0x4, fixed_abs, tag = 'smem constant byte address 0x4 - core index']
  #allocation1 [shape = 'u32[144,128]{1,0:T(1,128)}', space=vmem, size = 0x12000, scoped, tag = 'internal scratch']
  #allocation2 [shape = 'bf16[1,33,128]{2,1,0:T(8,128)(2,1)}', space=vmem, size = 0x2800, scoped, tag = 'scratch operand']
  %s0 = inlined_call_operand.vmem [shape: f32[32,128], index: 0, kind: input, shape index: {}]
  %s1 = inlined_call_operand.vmem [shape: bf16[32,128], index: 1, kind: input, shape index: {}]
  %s2 = inlined_call_operand.vmem [shape: bf16[384,128], index: 2, kind: input, shape index: {}]
  %s3 = inlined_call_operand.vmem [shape: f32[1,128], index: 3, kind: input, shape index: {}]
  %s4 = inlined_call_operand.vmem [shape: f32[1,128], index: 4, kind: input, shape index: {}]
  %s5 = inlined_call_operand.vmem [shape: f32[32,128], index: 5, kind: output, shape index: {}]
  %s6 = sld [smem:[#allocation0]]
  $region53: #{basic_block_forward_nhwc.3} parent=0
    _
  %s8 = ssub.s32 1, %s6
  %s9 = scalar_select 0, %s8, %s6
  loop: start=0, step=1, limit=4
  $region2: #{basic_block_forward_nhwc.3} parent=0 // loop_pre_header
    _
  $region3: #{basic_block_forward_nhwc.3} parent=0 // loop_header
    %s11 = sphi 0, %s15
    %p12 = scmp.ge.s32.totalorder %s11, 4
    %s21 = sphi 0, %s23
    %s24 = sphi 0, %s21
    %s25 = sphi 0, %s24
    %s41 = sphi 0, %s25
    %s47 = sphi 0, %s49
    %s50 = sphi 0, %s47
    %s51 = sphi 0, %s50
    %s67 = sphi 0, %s51
    %s71 = sphi 0, %s71
    %s73 = sphi 0, %s71
    %s74 = sphi 0, %s73
    %s88 = sphi 0, %s74
    %s92 = sphi 0, %s92
    %s94 = sphi 0, %s92
    %s95 = sphi 0, %s94
    %s109 = sphi 0, %s95
    %s113 = sphi 0, %s113
    %s115 = sphi 0, %s113
    %s116 = sphi 0, %s115
    %s130 = sphi 0, %s116
    %s136 = sphi 0, %s138
    %s139 = sphi 0, %s136
    %s140 = sphi 0, %s139
    %s156 = sphi 0, %s140
  $region4: #{basic_block_forward_nhwc.3} parent=0 // loop_header_branch
    %14 = sbr.rel (%p12) target = $region8
  $region5: #{basic_block_forward_nhwc.3} parent=0 // loop_body
    %s16 = ssub.s32 %s11, 1
    %s17 = ssub.s32 %s11, 2
    %s18 = sadd.s32 %s11, 1
    %s19 = ssub.s32 %s11, %s18
    %p20 = scmp.eq.s32.totalorder %s19, 0
    %s22 = sadd.s32 %s21, 1
    %s23 = scalar_select %p20, %s21, %s22
    %p26 = pneg %p20
    %p27 = scmp.eq.s32.totalorder %s11, 1
    %p28 = por %p26, %p27
    %p29 = scmp.ne.s32.totalorder %s21, %s24
    %p30 = scmp.eq.s32.totalorder %s11, 0
    %p31 = por %p29, %p30
    %p32 = scmp.ne.s32.totalorder %s21, %s24
    %p33 = scmp.eq.s32.totalorder %s16, 1
    %p34 = por %p32, %p33
    %p35 = scmp.ne.s32.totalorder %s24, %s25
    %p36 = scmp.eq.s32.totalorder %s16, 0
    %p37 = por %p35, %p36
    %p38 = scmp.ne.s32.totalorder %s24, %s25
    %p39 = scmp.eq.s32.totalorder %s17, 1
    %p40 = por %p38, %p39
    %p42 = scmp.ne.s32.totalorder %s25, %s41
    %p43 = scmp.eq.s32.totalorder %s17, 0
    %p44 = por %p42, %p43
    %s45 = ssub.s32 %s11, %s18
    %p46 = scmp.eq.s32.totalorder %s45, 0
    %s48 = sadd.s32 %s47, 1
    %s49 = scalar_select %p46, %s47, %s48
    %p52 = pneg %p46
    %p53 = scmp.eq.s32.totalorder %s11, 1
    %p54 = por %p52, %p53
    %p55 = scmp.ne.s32.totalorder %s47, %s50
    %p56 = scmp.eq.s32.totalorder %s11, 0
    %p57 = por %p55, %p56
    %p58 = scmp.ne.s32.totalorder %s47, %s50
    %p59 = scmp.eq.s32.totalorder %s16, 1
    %p60 = por %p58, %p59
    %p61 = scmp.ne.s32.totalorder %s50, %s51
    %p62 = scmp.eq.s32.totalorder %s16, 0
    %p63 = por %p61, %p62
    %p64 = scmp.ne.s32.totalorder %s50, %s51
    %p65 = scmp.eq.s32.totalorder %s17, 1
    %p66 = por %p64, %p65
    %p68 = scmp.ne.s32.totalorder %s51, %s67
    %p69 = scmp.eq.s32.totalorder %s17, 0
    %p70 = por %p68, %p69
    %s72 = sadd.s32 %s71, 1
    %p75 = scmp.eq.s32.totalorder %s11, 1
    %p76 = scmp.ne.s32.totalorder %s71, %s73
    %p77 = scmp.eq.s32.totalorder %s11, 0
    %p78 = por %p76, %p77
    %p79 = scmp.ne.s32.totalorder %s71, %s73
    %p80 = scmp.eq.s32.totalorder %s16, 1
    %p81 = por %p79, %p80
    %p82 = scmp.ne.s32.totalorder %s73, %s74
    %p83 = scmp.eq.s32.totalorder %s16, 0
    %p84 = por %p82, %p83
    %p85 = scmp.ne.s32.totalorder %s73, %s74
    %p86 = scmp.eq.s32.totalorder %s17, 1
    %p87 = por %p85, %p86
    %p89 = scmp.ne.s32.totalorder %s74, %s88
    %p90 = scmp.eq.s32.totalorder %s17, 0
    %p91 = por %p89, %p90
    %s93 = sadd.s32 %s92, 1
    %p96 = scmp.eq.s32.totalorder %s11, 1
    %p97 = scmp.ne.s32.totalorder %s92, %s94
    %p98 = scmp.eq.s32.totalorder %s11, 0
    %p99 = por %p97, %p98
    %p100 = scmp.ne.s32.totalorder %s92, %s94
    %p101 = scmp.eq.s32.totalorder %s16, 1
    %p102 = por %p100, %p101
    %p103 = scmp.ne.s32.totalorder %s94, %s95
    %p104 = scmp.eq.s32.totalorder %s16, 0
    %p105 = por %p103, %p104
    %p106 = scmp.ne.s32.totalorder %s94, %s95
    %p107 = scmp.eq.s32.totalorder %s17, 1
    %p108 = por %p106, %p107
    %p110 = scmp.ne.s32.totalorder %s95, %s109
    %p111 = scmp.eq.s32.totalorder %s17, 0
    %p112 = por %p110, %p111
    %s114 = sadd.s32 %s113, 1
    %p117 = scmp.eq.s32.totalorder %s11, 1
    %p118 = scmp.ne.s32.totalorder %s113, %s115
    %p119 = scmp.eq.s32.totalorder %s11, 0
    %p120 = por %p118, %p119
    %p121 = scmp.ne.s32.totalorder %s113, %s115
    %p122 = scmp.eq.s32.totalorder %s16, 1
    %p123 = por %p121, %p122
    %p124 = scmp.ne.s32.totalorder %s115, %s116
    %p125 = scmp.eq.s32.totalorder %s16, 0
    %p126 = por %p124, %p125
    %p127 = scmp.ne.s32.totalorder %s115, %s116
    %p128 = scmp.eq.s32.totalorder %s17, 1
    %p129 = por %p127, %p128
    %p131 = scmp.ne.s32.totalorder %s116, %s130
    %p132 = scmp.eq.s32.totalorder %s17, 0
    %p133 = por %p131, %p132
    %s134 = ssub.s32 %s11, %s18
    %p135 = scmp.eq.s32.totalorder %s134, 0
    %s137 = sadd.s32 %s136, 1
    %s138 = scalar_select %p135, %s136, %s137
    %p141 = pneg %p135
    %p142 = scmp.eq.s32.totalorder %s11, 1
    %p143 = por %p141, %p142
    %p144 = scmp.ne.s32.totalorder %s136, %s139
    %p145 = scmp.eq.s32.totalorder %s11, 0
    %p146 = por %p144, %p145
    %p147 = scmp.ne.s32.totalorder %s136, %s139
    %p148 = scmp.eq.s32.totalorder %s16, 1
    %p149 = por %p147, %p148
    %p150 = scmp.ne.s32.totalorder %s139, %s140
    %p151 = scmp.eq.s32.totalorder %s16, 0
    %p152 = por %p150, %p151
    %p153 = scmp.ne.s32.totalorder %s139, %s140
    %p154 = scmp.eq.s32.totalorder %s17, 1
    %p155 = por %p153, %p154
    %p157 = scmp.ne.s32.totalorder %s140, %s156
    %p158 = scmp.eq.s32.totalorder %s17, 0
    %p159 = por %p157, %p158
    %p160 = scmp.le.s32.totalorder 1, %s11
    %p161 = scmp.lt.s32.totalorder %s11, 3
    %p162 = pnand %p160, %p161
    %p163 = pneg %p162
    // Predicated region
    $region9: #{basic_block_forward_nhwc.3} parent=5 // pred_check
      _
    $region10: #{basic_block_forward_nhwc.3} parent=5 // pred_check_branch
      %165 = sbr.rel (%p162) target = $region12
    $region11: #{basic_block_forward_nhwc.3} parent=5 // pred_region
      %s166 = ssub.s32 %s11, 1
      // Predicated region
      $region13: #{basic_block_forward_nhwc.3} parent=11 // pred_check
        %p167 = pneg %p84
      $region14: #{basic_block_forward_nhwc.3} parent=11 // pred_check_branch
        %169 = sbr.rel (%p167) target = $region16
      $region15: #{basic_block_forward_nhwc.3} parent=11 // pred_region
        _
      $region16: #{basic_block_forward_nhwc.3} parent=11 // pred_fallthru
        _
      // Predicated region
      $region17: #{basic_block_forward_nhwc.3} parent=11 // pred_check
        %p170 = pneg %p105
      $region18: #{basic_block_forward_nhwc.3} parent=11 // pred_check_branch
        %172 = sbr.rel (%p170) target = $region20
      $region19: #{basic_block_forward_nhwc.3} parent=11 // pred_region
        _
      $region20: #{basic_block_forward_nhwc.3} parent=11 // pred_fallthru
        _
      // Predicated region
      $region21: #{basic_block_forward_nhwc.3} parent=11 // pred_check
        %p173 = pneg %p126
      $region22: #{basic_block_forward_nhwc.3} parent=11 // pred_check_branch
        %175 = sbr.rel (%p173) target = $region24
      $region23: #{basic_block_forward_nhwc.3} parent=11 // pred_region
        _
      $region24: #{basic_block_forward_nhwc.3} parent=11 // pred_fallthru
        _
    $region12: #{basic_block_forward_nhwc.3} parent=5 // pred_fallthru
      _
    %p176 = scmp.lt.s32.totalorder %s11, 2
    // Predicated region
    $region25: #{basic_block_forward_nhwc.3} parent=5 // pred_check
      %p177 = pneg %p176
    $region26: #{basic_block_forward_nhwc.3} parent=5 // pred_check_branch
      %179 = sbr.rel (%p177) target = $region28
    $region27: #{basic_block_forward_nhwc.3} parent=5 // pred_region
      // Predicated region
      $region29: #{basic_block_forward_nhwc.3} parent=27 // pred_check
        %p180 = pneg %p31
      $region30: #{basic_block_forward_nhwc.3} parent=27 // pred_check_branch
        %182 = sbr.rel (%p180) target = $region32
      $region31: #{basic_block_forward_nhwc.3} parent=27 // pred_region
        %s183 = smul.u32 2, %s11
        %p184 = scmp.lt.s32.totalorder %s183, 3
        %s185 = scalar_select %p184, %s183, 3
        %s186 = smul.addr %s185, 8
        %s187 = scalar_lea.vmem %s0, %s186
        %s188 = smul.u32 2, %s11
      $region32: #{basic_block_forward_nhwc.3} parent=27 // pred_fallthru
        _
      // Predicated region
      $region33: #{basic_block_forward_nhwc.3} parent=27 // pred_check
        %p189 = pneg %p57
      $region34: #{basic_block_forward_nhwc.3} parent=27 // pred_check_branch
        %191 = sbr.rel (%p189) target = $region36
      $region35: #{basic_block_forward_nhwc.3} parent=27 // pred_region
        %s192 = smul.u32 2, %s11
        %p193 = scmp.lt.s32.totalorder %s192, 3
        %s194 = scalar_select %p193, %s192, 3
        %s195 = smul.addr %s194, 4
        %s196 = scalar_lea.vmem %s1, %s195
        %s197 = smul.u32 2, %s11
      $region36: #{basic_block_forward_nhwc.3} parent=27 // pred_fallthru
        _
    $region28: #{basic_block_forward_nhwc.3} parent=5 // pred_fallthru
      _
    %p198 = scmp.le.s32.totalorder 1, %s11
    %p199 = scmp.lt.s32.totalorder %s11, 3
    %p200 = pnand %p198, %p199
    %p201 = pneg %p200
    // Predicated region
    $region37: #{basic_block_forward_nhwc.3} parent=5 // pred_check
      _
    $region38: #{basic_block_forward_nhwc.3} parent=5 // pred_check_branch
      %203 = sbr.rel (%p200) target = $region40
    $region39: #{basic_block_forward_nhwc.3} parent=5 // pred_region
      %s204 = ssub.s32 %s11, 1
      %s205 = smul.u32 2, %s16
      %p206 = scmp.lt.s32.totalorder %s205, 3
      %s207 = scalar_select %p206, %s205, 3
      %s208 = smul.addr %s207, 8
      %s209 = scalar_lea.vmem %s0, %s208
      %p210 = pneg %p37
      %p211 = pneg %p34
      %s212 = smul.u32 2, %s16
      %p213 = scmp.lt.s32.totalorder %s212, 3
      %s214 = scalar_select %p213, %s212, 3
      %s215 = smul.addr %s214, 4
      %s216 = scalar_lea.vmem %s1, %s215
      %p217 = pneg %p63
      %p218 = pneg %p60
      %p219 = pneg %p84
      %p220 = pneg %p81
      %p221 = pneg %p105
      %p222 = pneg %p102
      %p223 = pneg %p126
      %p224 = pneg %p123
      %p225 = pneg %p152
      %p226 = pneg %p149
      %s227 = smul.u32 2, %s16
      %p228 = scmp.lt.s32.totalorder %s227, 3
      %s229 = scalar_select %p228, %s227, 3
      %s230 = smul.addr %s229, 8
      %s231 = scalar_lea.vmem %s5, %s230
      %s232 = smul.u32 2, %s16
      %p233 = scmp.lt.s32.totalorder %s232, 3
      %s234 = scalar_select %p233, %s232, 3
      %s235 = smul.addr %s234, 8
      %s236 = scalar_lea.vmem %s0, %s235
      %s237 = smul.u32 2, %s16
      %s238 = smul.u32 2, %s16
      %p239 = scmp.lt.s32.totalorder %s238, 3
      %s240 = scalar_select %p239, %s238, 3
      %s241 = smul.addr %s240, 4
      %s242 = scalar_lea.vmem %s1, %s241
      %s243 = smul.u32 2, %s16
      %s244 = smul.u32 2, %s16
      %p245 = scmp.lt.s32.totalorder %s244, 3
      %s246 = scalar_select %p245, %s244, 3
      %s247 = smul.addr %s246, 8
      %s248 = scalar_lea.vmem %s5, %s247
      %s249 = smul.u32 2, %s16
      %v251 = vld [vmem:[%s242] sm:$0xf]
      %v252 = vld [vmem:[%s242 + $0x4] sm:$0xf]
      %v253 = vunpack.c.l.bf16 %v251
      %v254 = vunpack.c.l.bf16 %v252
      %v255 = vld [vmem:[%s3] sm:$0x1]
      %v257 = vlaneseq
      %v258 = vshrl.u32 %v257, 7
      %v259 = vsub.s32 0, %v258
      %v260 = vrot.slane %v255, %v259
      %v262 = vmul.f32 %v253, %v260
      %v263 = vmul.f32 %v254, %v260
      %v264 = vld [vmem:[%s4] sm:$0x1]
      %v266 = vlaneseq
      %v267 = vshrl.u32 %v266, 7
      %v268 = vsub.s32 0, %v267
      %v269 = vrot.slane %v264, %v268
      %v271 = vadd.f32 %v262, %v269
      %v272 = vadd.f32 %v263, %v269
      %v273 = vmax.f32 %v271, 0.0
      %v274 = vmax.f32 %v272, 0.0
      %v275 = vpack.c.bf16 %v274, %v273
      %vm276 = vcmask 1043459
      %vm277 = vsmask.f32 7950
      %vm278 = vmand %vm276, %vm277
      %v279 = vld [vmem:[#allocation2 + $0x4] sm:$0x8]
      %v280 = vsel %vm278, 0, %v279
      %281 = vst [vmem:[#allocation2 + $0x4] sm:$0x8] %v280
      %vm282 = vcmask 1040384
      %vm283 = vsmask.f32 256
      %vm284 = vmand %vm282, %vm283
      %v285 = vld [vmem:[#allocation2 + $0x10] sm:$0x1]
      %v286 = vsel %vm284, 0, %v285
      %287 = vst [vmem:[#allocation2 + $0x10] sm:$0x1] %v286
      %v289 = vunpack.c.l.b16 %v275
      %v290 = vunpack.c.h.b16 %v275
      %v291 = vpack.c.b16 %v289, %v289
      %v292 = vpack.c.b16 %v290, %v290
      %295 = vst [vmem:[#allocation2 + $0x8] sm:$0xf] %v291
      %296 = vst [vmem:[#allocation2 + $0xc] sm:$0xf] %v292
      %v297 = vld [vmem:[#allocation2 + $0x4] sm:$0x8]
      %v298 = vld [vmem:[#allocation2 + $0x8] sm:$0xf]
      %v299 = vld [vmem:[#allocation2 + $0xc] sm:$0xf]
      %v300 = vld [vmem:[#allocation2 + $0x10] sm:$0x1]
      %v304 = vunpack.c.l.b16 %v297
      %v305 = vunpack.c.l.b16 %v298
      %v306 = vunpack.c.l.b16 %v299
      %v307 = vpack.c.b16 %v305, %v304
      %v308 = vpack.c.b16 %v306, %v306
      %v309 = vpack.c.b16 %v306, %v305
      %v311 = vshrl.u32 %v309, 16
      %v313 = vrot.slane %v311, 4
      %v314 = vshll.u32 %v309, 16
      %v316 = vrot.slane %v314, 5
      %v317 = vor.u32 %v313, %v316
      %v319 = vunpack.c.l.b16 %v300
      %v320 = vpack.c.b16 %v319, %v319
      %vm321 = vcmask 1042432
      %v322 = vrot.slane %v309, 5
      %v323 = vrot.slane %v320, 5
      %v324 = vsel %vm321, %v322, %v323
      %v325 = vld [vmem:[%s2] sm:$0xf]
      %v326 = vld [vmem:[%s2 + $0x4] sm:$0xf]
      %v327 = vld [vmem:[%s2 + $0x8] sm:$0xf]
      %v328 = vld [vmem:[%s2 + $0xc] sm:$0xf]
      %v329 = vld [vmem:[%s2 + $0x10] sm:$0xf]
      %v330 = vld [vmem:[%s2 + $0x14] sm:$0xf]
      %v331 = vld [vmem:[%s2 + $0x18] sm:$0xf]
      %v332 = vld [vmem:[%s2 + $0x1c] sm:$0xf]
      %v333 = vld [vmem:[%s2 + $0x20] sm:$0xf]
      %v334 = vld [vmem:[%s2 + $0x24] sm:$0xf]
      %v335 = vld [vmem:[%s2 + $0x28] sm:$0xf]
      %v336 = vld [vmem:[%s2 + $0x2c] sm:$0xf]
      %v337 = vld [vmem:[%s2 + $0x30] sm:$0xf]
      %v338 = vld [vmem:[%s2 + $0x34] sm:$0xf]
      %v339 = vld [vmem:[%s2 + $0x38] sm:$0xf]
      %v340 = vld [vmem:[%s2 + $0x3c] sm:$0xf]
      %v341 = vld [vmem:[%s2 + $0x40] sm:$0xf]
      %v342 = vld [vmem:[%s2 + $0x44] sm:$0xf]
      %v343 = vld [vmem:[%s2 + $0x48] sm:$0xf]
      %v344 = vld [vmem:[%s2 + $0x4c] sm:$0xf]
      %v345 = vld [vmem:[%s2 + $0x50] sm:$0xf]
      %v346 = vld [vmem:[%s2 + $0x54] sm:$0xf]
      %v347 = vld [vmem:[%s2 + $0x58] sm:$0xf]
      %v348 = vld [vmem:[%s2 + $0x5c] sm:$0xf]
      %v349 = vld [vmem:[%s2 + $0x60] sm:$0xf]
      %v350 = vld [vmem:[%s2 + $0x64] sm:$0xf]
      %v351 = vld [vmem:[%s2 + $0x68] sm:$0xf]
      %v352 = vld [vmem:[%s2 + $0x6c] sm:$0xf]
      %v353 = vld [vmem:[%s2 + $0x70] sm:$0xf]
      %v354 = vld [vmem:[%s2 + $0x74] sm:$0xf]
      %v355 = vld [vmem:[%s2 + $0x78] sm:$0xf]
      %v356 = vld [vmem:[%s2 + $0x7c] sm:$0xf]
      %v357 = vld [vmem:[%s2 + $0x80] sm:$0xf]
      %v358 = vld [vmem:[%s2 + $0x84] sm:$0xf]
      %v359 = vld [vmem:[%s2 + $0x88] sm:$0xf]
      %v360 = vld [vmem:[%s2 + $0x8c] sm:$0xf]
      %v361 = vld [vmem:[%s2 + $0x90] sm:$0xf]
      %v362 = vld [vmem:[%s2 + $0x94] sm:$0xf]
      %v363 = vld [vmem:[%s2 + $0x98] sm:$0xf]
      %v364 = vld [vmem:[%s2 + $0x9c] sm:$0xf]
      %v365 = vld [vmem:[%s2 + $0xa0] sm:$0xf]
      %v366 = vld [vmem:[%s2 + $0xa4] sm:$0xf]
      %v367 = vld [vmem:[%s2 + $0xa8] sm:$0xf]
      %v368 = vld [vmem:[%s2 + $0xac] sm:$0xf]
      %v369 = vld [vmem:[%s2 + $0xb0] sm:$0xf]
      %v370 = vld [vmem:[%s2 + $0xb4] sm:$0xf]
      %v371 = vld [vmem:[%s2 + $0xb8] sm:$0xf]
      %v372 = vld [vmem:[%s2 + $0xbc] sm:$0xf]
      %v373 = vld [vmem:[%s236] sm:$0xff]
      %v374 = vld [vmem:[%s236 + $0x8] sm:$0xff]
      %vm375 = vsmask.f32 4352
      %v377 = vshrl.u32 %v307, 16
      %v379 = vrot.slane %v377, 3
      %v380 = vshll.u32 %v307, 16
      %v382 = vrot.slane %v380, 4
      %v383 = vor.u32 %v379, %v382
      %v385 = vshrl.u32 %v308, 16
      %v387 = vrot.slane %v385, 3
      %v388 = vshll.u32 %v308, 16
      %v390 = vrot.slane %v388, 4
      %v391 = vor.u32 %v387, %v390
      %v392 = vsel %vm375, %v383, %v391
      %v394 = vshrl.u32 %v317, 16
      %v396 = vrot.slane %v394, 3
      %v397 = vshll.u32 %v317, 16
      %v399 = vrot.slane %v397, 4
      %v400 = vor.u32 %v396, %v399
      %v401 = vsel %vm375, %v400, %v400
      %v403 = vshrl.u32 %v322, 16
      %v405 = vrot.slane %v403, 3
      %v406 = vshll.u32 %v322, 16
      %v408 = vrot.slane %v406, 4
      %v409 = vor.u32 %v405, %v408
      %v411 = vshrl.u32 %v324, 16
      %v413 = vrot.slane %v411, 3
      %v414 = vshll.u32 %v324, 16
      %v416 = vrot.slane %v414, 4
      %v417 = vor.u32 %v413, %v416
      %v418 = vsel %vm375, %v409, %v417
      %v470 = vunpack.c.l.b16 %v325
      %v471 = vunpack.c.l.b16 %v326
      %v472 = vunpack.c.l.b16 %v327
      %v473 = vunpack.c.l.b16 %v328
      %v474 = vunpack.c.l.b16 %v329
      %v475 = vunpack.c.l.b16 %v330
      %v476 = vunpack.c.l.b16 %v331
      %v477 = vunpack.c.l.b16 %v332
      %v478 = vunpack.c.l.b16 %v333
      %v479 = vunpack.c.l.b16 %v334
      %v480 = vunpack.c.l.b16 %v335
      %v481 = vunpack.c.l.b16 %v336
      %v482 = vunpack.c.l.b16 %v337
      %v483 = vunpack.c.l.b16 %v338
      %v484 = vunpack.c.l.b16 %v339
      %v485 = vunpack.c.l.b16 %v340
      %v486 = vunpack.c.l.b16 %v341
      %v487 = vunpack.c.l.b16 %v342
      %v488 = vunpack.c.l.b16 %v343
      %v489 = vunpack.c.l.b16 %v344
      %v490 = vunpack.c.l.b16 %v345
      %v491 = vunpack.c.l.b16 %v346
      %v492 = vunpack.c.l.b16 %v347
      %v493 = vunpack.c.l.b16 %v348
      %v494 = vunpack.c.l.b16 %v349
      %v495 = vunpack.c.l.b16 %v350
      %v496 = vunpack.c.l.b16 %v351
      %v497 = vunpack.c.l.b16 %v352
      %v498 = vunpack.c.l.b16 %v353
      %v499 = vunpack.c.l.b16 %v354
      %v500 = vunpack.c.l.b16 %v355
      %v501 = vunpack.c.l.b16 %v356
      %v502 = vunpack.c.l.b16 %v357
      %v503 = vunpack.c.l.b16 %v358
      %v504 = vunpack.c.l.b16 %v359
      %v505 = vunpack.c.l.b16 %v360
      %v506 = vunpack.c.l.b16 %v361
      %v507 = vunpack.c.l.b16 %v362
      %v508 = vunpack.c.l.b16 %v363
      %v509 = vunpack.c.l.b16 %v364
      %v510 = vunpack.c.l.b16 %v365
      %v511 = vunpack.c.l.b16 %v366
      %v512 = vunpack.c.l.b16 %v367
      %v513 = vunpack.c.l.b16 %v368
      %v514 = vunpack.c.l.b16 %v369
      %v515 = vunpack.c.l.b16 %v370
      %v516 = vunpack.c.l.b16 %v371
      %v517 = vunpack.c.l.b16 %v372
      %v518 = vpack.c.b16 %v471, %v470
      %v519 = vpack.c.b16 %v473, %v472
      %v520 = vpack.c.b16 %v475, %v474
      %v521 = vpack.c.b16 %v477, %v476
      %v522 = vpack.c.b16 %v479, %v478
      %v523 = vpack.c.b16 %v481, %v480
      %v524 = vpack.c.b16 %v483, %v482
      %v525 = vpack.c.b16 %v485, %v484
      %v526 = vpack.c.b16 %v487, %v486
      %v527 = vpack.c.b16 %v489, %v488
      %v528 = vpack.c.b16 %v491, %v490
      %v529 = vpack.c.b16 %v493, %v492
      %v530 = vpack.c.b16 %v495, %v494
      %v531 = vpack.c.b16 %v497, %v496
      %v532 = vpack.c.b16 %v499, %v498
      %v533 = vpack.c.b16 %v501, %v500
      %v534 = vpack.c.b16 %v503, %v502
      %v535 = vpack.c.b16 %v505, %v504
      %v536 = vpack.c.b16 %v507, %v506
      %v537 = vpack.c.b16 %v509, %v508
      %v538 = vpack.c.b16 %v511, %v510
      %v539 = vpack.c.b16 %v513, %v512
      %v540 = vpack.c.b16 %v515, %v514
      %v541 = vpack.c.b16 %v517, %v516
      %566 = vmatprep.subr.bf16.mxu0 0
      %567 = vmatpush1.bf16.msra.mxu0 %v518
      %568 = vmatprep.subr.bf16.mxu0 0
      %569 = vmatpush1.bf16.msra.mxu0 %v519
      %570 = vmatprep.subr.bf16.mxu0 0
      %571 = vmatpush1.bf16.msra.mxu0 %v520
      %572 = vmatprep.subr.bf16.mxu0 0
      %573 = vmatpush1.bf16.msra.mxu0 %v521
      %574 = vmatprep.subr.bf16.mxu0 0
      %575 = vmatpush1.bf16.msra.mxu0 %v522
      %576 = vmatprep.subr.bf16.mxu0 0
      %577 = vmatpush1.bf16.msra.mxu0 %v523
      %578 = vmatprep.subr.bf16.mxu0 0
      %579 = vmatpush1.bf16.msra.mxu0 %v524
      %580 = vmatprep.subr.bf16.mxu0 0
      %581 = vmatpush1.bf16.msra.mxu0 %v525
      %582 = vmatprep.subr.bf16.mxu0 0
      %583 = vmatpush1.bf16.msra.mxu0 %v526
      %584 = vmatprep.subr.bf16.mxu0 0
      %585 = vmatpush1.bf16.msra.mxu0 %v527
      %586 = vmatprep.subr.bf16.mxu0 0
      %587 = vmatpush1.bf16.msra.mxu0 %v528
      %588 = vmatprep.subr.bf16.mxu0 0
      %589 = vmatpush1.bf16.msra.mxu0 %v529
      %590 = vmatprep.subr.bf16.mxu0 0
      %591 = vmatpush1.bf16.msra.mxu0 %v530
      %592 = vmatprep.subr.bf16.mxu0 0
      %593 = vmatpush1.bf16.msra.mxu0 %v531
      %594 = vmatprep.subr.bf16.mxu0 0
      %595 = vmatpush1.bf16.msra.mxu0 %v532
      %596 = vmatprep.subr.bf16.mxu0 0
      %597 = vmatpush1.bf16.msra.mxu0 %v533
      %598 = vmatprep.mubr.bf16.mxu0 %v401
      %599 = vmatmul.mubr.bf16.gmra.mrb[0].mxu0 %v392
      %v600 = vpop.f32.mrb[0].mxu0
      %v601 = vadd.f32 %v373, %v600
      %v602 = vpop.f32.mrb[0].mxu0
      %v603 = vpop.f32.mrb[0].mxu0
      %v604 = vadd.f32 %v374, %v603
      %v605 = vpop.f32.mrb[0].mxu0
      %606 = vdwg.mxu0
      %607 = vmatprep.subr.bf16.mxu0 0
      %608 = vmatpush1.bf16.msra.mxu0 %v534
      %609 = vmatprep.subr.bf16.mxu0 0
      %610 = vmatpush1.bf16.msra.mxu0 %v535
      %611 = vmatprep.subr.bf16.mxu0 0
      %612 = vmatpush1.bf16.msra.mxu0 %v536
      %613 = vmatprep.subr.bf16.mxu0 0
      %614 = vmatpush1.bf16.msra.mxu0 %v537
      %615 = vmatprep.subr.bf16.mxu0 0
      %616 = vmatpush1.bf16.msra.mxu0 %v538
      %617 = vmatprep.subr.bf16.mxu0 0
      %618 = vmatpush1.bf16.msra.mxu0 %v539
      %619 = vmatprep.subr.bf16.mxu0 0
      %620 = vmatpush1.bf16.msra.mxu0 %v540
      %621 = vmatprep.subr.bf16.mxu0 0
      %622 = vmatpush1.bf16.msra.mxu0 %v541
      %623 = vmatprep.subr.bf16.mxu0 0
      %624 = vmatpush1.bf16.msra.mxu0 0
      %625 = vmatprep.subr.bf16.mxu0 0
      %626 = vmatpush1.bf16.msra.mxu0 0
      %627 = vmatprep.subr.bf16.mxu0 0
      %628 = vmatpush1.bf16.msra.mxu0 0
      %629 = vmatprep.subr.bf16.mxu0 0
      %630 = vmatpush1.bf16.msra.mxu0 0
      %631 = vmatprep.subr.bf16.mxu0 0
      %632 = vmatpush1.bf16.msra.mxu0 0
      %633 = vmatprep.subr.bf16.mxu0 0
      %634 = vmatpush1.bf16.msra.mxu0 0
      %635 = vmatprep.subr.bf16.mxu0 0
      %636 = vmatpush1.bf16.msra.mxu0 0
      %637 = vmatprep.subr.bf16.mxu0 0
      %638 = vmatpush1.bf16.msra.mxu0 0
      %639 = vmatprep.mubr.bf16.mxu0 0
      %640 = vmatmul.mubr.bf16.gmra.mrb[0].mxu0 %v418
      %v641 = vpop.f32.mrb[0].mxu0
      %v642 = vadd.f32 %v601, %v641
      %v643 = vpop.f32.mrb[0].mxu0
      %v644 = vpop.f32.mrb[0].mxu0
      %v645 = vadd.f32 %v604, %v644
      %v646 = vpop.f32.mrb[0].mxu0
      %647 = vdwg.mxu0
      %648 = vst [vmem:[%s248] sm:$0xff] %v642
      %649 = vst [vmem:[%s248 + $0x8] sm:$0xff] %v645
      %s650 = smul.u32 2, %s16
      %p651 = scmp.lt.s32.totalorder %s650, 3
      %s652 = scalar_select %p651, %s650, 3
      %s653 = smul.addr %s652, 8
      %s654 = scalar_lea.vmem %s5, %s653
      // Predicated region
      $region41: #{basic_block_forward_nhwc.3} parent=39 // pred_check
        %p655 = pneg %p149
      $region42: #{basic_block_forward_nhwc.3} parent=39 // pred_check_branch
        %657 = sbr.rel (%p655) target = $region44
      $region43: #{basic_block_forward_nhwc.3} parent=39 // pred_region
        %s658 = smul.u32 2, %s16
      $region44: #{basic_block_forward_nhwc.3} parent=39 // pred_fallthru
        _
    $region40: #{basic_block_forward_nhwc.3} parent=5 // pred_fallthru
      _
    %p659 = scmp.le.s32.totalorder 2, %s11
    // Predicated region
    $region45: #{basic_block_forward_nhwc.3} parent=5 // pred_check
      %p660 = pneg %p659
    $region46: #{basic_block_forward_nhwc.3} parent=5 // pred_check_branch
      %662 = sbr.rel (%p660) target = $region48
    $region47: #{basic_block_forward_nhwc.3} parent=5 // pred_region
      %s663 = ssub.s32 %s11, 2
      // Predicated region
      $region49: #{basic_block_forward_nhwc.3} parent=47 // pred_check
        %p664 = pneg %p155
      $region50: #{basic_block_forward_nhwc.3} parent=47 // pred_check_branch
        %666 = sbr.rel (%p664) target = $region52
      $region51: #{basic_block_forward_nhwc.3} parent=47 // pred_region
        %s667 = smul.u32 2, %s17
        %p668 = scmp.lt.s32.totalorder %s667, 3
        %s669 = scalar_select %p668, %s667, 3
        %s670 = smul.addr %s669, 8
        %s671 = scalar_lea.vmem %s5, %s670
      $region52: #{basic_block_forward_nhwc.3} parent=47 // pred_fallthru
        _
    $region48: #{basic_block_forward_nhwc.3} parent=5 // pred_fallthru
      _
  $region6: #{basic_block_forward_nhwc.3} parent=0 // loop_footer
    %s15 = sadd.s32 1, %s11
  $region7: #{basic_block_forward_nhwc.3} parent=0 // loop_footer_branch
    %10 = sbr.rel target = $region3
  $region8: #{basic_block_forward_nhwc.3} parent=0 // loop_exit
    _

</llo_original>
